<compile_context>
chip_gen: v7x
topology: tpu7x:2x2x1
jax: 0.10.0
libtpu: 0.0.40
codegen_flags: <defaults>
</compile_context>

<pallas_src>
import functools

import jax
import jax.numpy as jnp
from jax.experimental import pallas as pl
from jax.experimental.pallas import tpu as pltpu


# ----------------------------- Pallas kernels ------------------------------ #

def _linear_relu_kernel(z_ref, w_ref, b_ref, o_ref):
    # (B, K) @ (K, TN) + (1, TN) -> ReLU, stored bf16. Tiled over the wide N axis.
    y = jnp.dot(z_ref[...], w_ref[...], preferred_element_type=jnp.float32)
    y = jnp.maximum(y + b_ref[...], 0.0)
    o_ref[...] = y.astype(o_ref.dtype)


def _deconv_block_kernel(x_ref, scale_ref, shift_ref, w_ref, b_ref,
                         y_ref, stats_ref, *, m_total, block_m, out_act):
    """Fused: folded-BN affine + ReLU on the input tile, deconv-as-matmul + bias,
    optional tanh, and per-tile partial BN stats of the output (sum, sum^2)."""
    x = x_ref[...].astype(jnp.float32)
    x = x * scale_ref[...] + shift_ref[...]          # previous BN (identity for dc1)
    x = jnp.maximum(x, 0.0)                          # ReLU (idempotent for dc1)
    y = jnp.dot(x.astype(jnp.bfloat16), w_ref[...],
                preferred_element_type=jnp.float32)
    y = y + b_ref[...]
    if out_act == "tanh":
        y = jnp.tanh(y)
    y_ref[...] = y.astype(y_ref.dtype)

    # Partial BN statistics; rows beyond the true extent (ragged last tile) are masked.
    row0 = pl.program_id(0) * block_m
    rows = row0 + jax.lax.broadcasted_iota(jnp.int32, (block_m, 1), 0)
    valid = (rows < m_total).astype(jnp.float32)
    ym = y * valid
    s = jnp.sum(ym, axis=0, keepdims=True)           # (1, N)
    ss = jnp.sum(ym * ym, axis=0, keepdims=True)     # (1, N)
    rid = jax.lax.broadcasted_iota(jnp.int32, (8, 1), 0)
    stats_ref[...] = jnp.where(rid == 0, s, 0.0) + jnp.where(rid == 1, ss, 0.0)


# ----------------------------- kernel wrappers ------------------------------ #

def _linear_relu(z, w, b, *, tn_cap=2048):
    Bz, K = z.shape
    _, N = w.shape
    tn = N if N <= tn_cap else tn_cap                # tn_cap multiple of 128
    grid = (pl.cdiv(N, tn),)
    return pl.pallas_call(
        _linear_relu_kernel,
        grid=grid,
        in_specs=[
            pl.BlockSpec((Bz, K), lambda j: (0, 0)),
            pl.BlockSpec((K, tn), lambda j: (0, j)),
            pl.BlockSpec((1, tn), lambda j: (0, j)),
        ],
        out_specs=pl.BlockSpec((Bz, tn), lambda j: (0, j)),
        out_shape=jax.ShapeDtypeStruct((Bz, N), jnp.bfloat16),
        compiler_params=pltpu.CompilerParams(dimension_semantics=("parallel",)),
    )(z, w, b)


def _fused_deconv(x, scale, shift, w, b, *, out_dtype, out_act, tm_cap=2048):
    M, Cin = x.shape
    _, N = w.shape
    tm = M if M <= tm_cap else tm_cap                # tm_cap multiple of 8
    ntiles = pl.cdiv(M, tm)
    kernel = functools.partial(_deconv_block_kernel, m_total=M, block_m=tm,
                               out_act=out_act)
    y, stats = pl.pallas_call(
        kernel,
        grid=(ntiles,),
        in_specs=[
            pl.BlockSpec((tm, Cin), lambda i: (i, 0)),
            pl.BlockSpec((1, Cin), lambda i: (0, 0)),
            pl.BlockSpec((1, Cin), lambda i: (0, 0)),
            pl.BlockSpec((Cin, N), lambda i: (0, 0)),
            pl.BlockSpec((1, N), lambda i: (0, 0)),
        ],
        out_specs=[
            pl.BlockSpec((tm, N), lambda i: (i, 0)),
            pl.BlockSpec((8, N), lambda i: (i, 0)),
        ],
        out_shape=[
            jax.ShapeDtypeStruct((M, N), out_dtype),
            jax.ShapeDtypeStruct((ntiles * 8, N), jnp.float32),
        ],
        compiler_params=pltpu.CompilerParams(dimension_semantics=("parallel",)),
    )(x, scale, shift, w, b)
    return y, stats


def _finalize_bn(stats, m_in, gamma, beta, c_out, eps=1e-5):
    """Per-tile (sum, sum^2) partials -> folded per-channel affine (scale, shift)
    equal to train-mode BatchNorm2d (biased variance, eps=1e-5).  Tiny arrays."""
    st = stats.reshape(-1, 8, 4 * c_out)
    total = jnp.sum(st[:, 0, :], axis=0)             # columns ordered (di, dj, c)
    total_sq = jnp.sum(st[:, 1, :], axis=0)
    s_c = total.reshape(4, c_out).sum(axis=0)
    ss_c = total_sq.reshape(4, c_out).sum(axis=0)
    n = 4.0 * m_in                                   # samples/channel = B*H_out*W_out
    mean = s_c / n
    var = ss_c / n - mean * mean                     # biased variance
    inv = jax.lax.rsqrt(var + eps)
    scale = gamma * inv
    shift = beta - mean * scale
    return scale.reshape(1, c_out), shift.reshape(1, c_out)


# ------------------------------ parameters ---------------------------------- #

def init_params(key, size, dim, z_dim):
    """Deterministic synthetic parameters in PyTorch layouts."""
    H0, W0 = size[1] // 8, size[2] // 8
    out_f = H0 * W0 * 4 * dim
    keys = jax.random.split(key, 12)
    p = {}
    p["lin_w"] = 0.05 * jax.random.normal(keys[0], (out_f, z_dim), jnp.float32)
    p["lin_b"] = 0.05 * jax.random.normal(keys[1], (out_f,), jnp.float32)

    def deconv_w(k, cin, cout):      # ConvTranspose2d weight: (C_in, C_out, 2, 2)
        return 0.05 * jax.random.normal(k, (cin, cout, 2, 2), jnp.float32)

    p["dc1_w"] = deconv_w(keys[2], 4 * dim, 2 * dim)
    p["dc1_b"] = 0.05 * jax.random.normal(keys[3], (2 * dim,), jnp.float32)
    p["bn1_g"] = 1.0 + 0.1 * jax.random.normal(keys[4], (2 * dim,), jnp.float32)
    p["bn1_b"] = 0.1 * jax.random.normal(keys[5], (2 * dim,), jnp.float32)

    p["dc2_w"] = deconv_w(keys[6], 2 * dim, dim)
    p["dc2_b"] = 0.05 * jax.random.normal(keys[7], (dim,), jnp.float32)
    p["bn2_g"] = 1.0 + 0.1 * jax.random.normal(keys[8], (dim,), jnp.float32)
    p["bn2_b"] = 0.1 * jax.random.normal(keys[9], (dim,), jnp.float32)

    p["dc3_w"] = deconv_w(keys[10], dim, 3)
    p["dc3_b"] = 0.05 * jax.random.normal(keys[11], (3,), jnp.float32)
    return p


def prepare_params(p, size, dim):
    """PyTorch layouts -> kernel layouts (column permutations + bf16 weights)."""
    H0, W0 = size[1] // 8, size[2] // 8
    z_dim = p["lin_w"].shape[1]
    out_f = H0 * W0 * 4 * dim
    q = {}
    # Linear: output features reordered (c,h,w) -> (h,w,c); weight stored (in, out).
    w = p["lin_w"].reshape(4 * dim, H0, W0, z_dim)
    w = jnp.transpose(w, (1, 2, 0, 3)).reshape(out_f, z_dim)
    q["lin_w"] = jnp.transpose(w, (1, 0)).astype(jnp.bfloat16)
    b = jnp.transpose(p["lin_b"].reshape(4 * dim, H0, W0), (1, 2, 0))
    q["lin_b"] = b.reshape(1, out_f).astype(jnp.float32)

    def dc(wk, bk):
        wt = p[wk]                                    # (Cin, Cout, 2, 2)
        cin, cout = wt.shape[0], wt.shape[1]
        wm = jnp.transpose(wt, (0, 2, 3, 1)).reshape(cin, 4 * cout)   # cols (di,dj,c)
        bm = jnp.tile(p[bk], 4).reshape(1, 4 * cout)
        return wm.astype(jnp.bfloat16), bm.astype(jnp.float32)

    q["dc1_w"], q["dc1_b"] = dc("dc1_w", "dc1_b")
    q["dc2_w"], q["dc2_b"] = dc("dc2_w", "dc2_b")
    q["dc3_w"], q["dc3_b"] = dc("dc3_w", "dc3_b")
    for k in ("bn1_g", "bn1_b", "bn2_g", "bn2_b"):
        q[k] = p[k].astype(jnp.float32)
    return q


# ------------------------------ forward pass -------------------------------- #

def generator_forward(params, z, *, size, dim):
    B = z.shape[0]
    H0, W0 = size[1] // 8, size[2] // 8

    # preprocess: Linear + ReLU (columns pre-permuted to (h, w, c)).
    h = _linear_relu(z.astype(jnp.bfloat16), params["lin_w"], params["lin_b"])
    x1 = h.reshape(B * H0 * W0, 4 * dim)              # rows (b,h0,w0): free reshape

    ident_s = jnp.ones((1, 4 * dim), jnp.float32)
    ident_t = jnp.zeros((1, 4 * dim), jnp.float32)

    # block1 deconv (+ BN1 partial stats fused in-kernel).
    y1, st1 = _fused_deconv(x1, ident_s, ident_t, params["dc1_w"], params["dc1_b"],
                            out_dtype=jnp.bfloat16, out_act="none")
    sc1, sh1 = _finalize_bn(st1, x1.shape[0], params["bn1_g"], params["bn1_b"], 2 * dim)
    x2 = y1.reshape(4 * x1.shape[0], 2 * dim)         # 2x2 scatter: free reshape

    # BN1 + ReLU fused into block2 deconv (+ BN2 partial stats).
    y2, st2 = _fused_deconv(x2, sc1, sh1, params["dc2_w"], params["dc2_b"],
                            out_dtype=jnp.bfloat16, out_act="none")
    sc2, sh2 = _finalize_bn(st2, x2.shape[0], params["bn2_g"], params["bn2_b"], dim)
    x3 = y2.reshape(4 * x2.shape[0], dim)

    # BN2 + ReLU fused into deconv_out + tanh (stats output unused for this layer).
    y3, _ = _fused_deconv(x3, sc2, sh2, params["dc3_w"], params["dc3_b"],
                          out_dtype=jnp.float32, out_act="tanh")

    # Single un-permute: hierarchical pixel order -> NCHW raster.
    y = y3.reshape(B, H0, W0, 2, 2, 2, 2, 2, 2, 3)
    y = jnp.transpose(y, (0, 9, 1, 3, 5, 7, 2, 4, 6, 8))
    return y.reshape(B, 3, 8 * H0, 8 * W0)


# ------------------------------ reference (f32, plain JAX) ------------------ #

def reference_forward(p, z, size, dim):
    B = z.shape[0]
    H0, W0 = size[1] // 8, size[2] // 8
    out = jnp.maximum(z @ p["lin_w"].T + p["lin_b"], 0.0)
    out = out.reshape(B, 4 * dim, H0, W0)

    def deconv(x, w, b):
        y = jnp.einsum("bchw,cokl->bohkwl", x, w)
        Bn, Co, H, _, W, _ = y.shape
        return y.reshape(Bn, Co, 2 * H, 2 * W) + b[None, :, None, None]

    def bn_relu(x, g, be, eps=1e-5):
        mean = x.mean(axis=(0, 2, 3), keepdims=True)
        var = x.var(axis=(0, 2, 3), keepdims=True)    # biased
        y = (x - mean) * jax.lax.rsqrt(var + eps)
        y = y * g[None, :, None, None] + be[None, :, None, None]
        return jnp.maximum(y, 0.0)

    out = bn_relu(deconv(out, p["dc1_w"], p["dc1_b"]), p["bn1_g"], p["bn1_b"])
    out = bn_relu(deconv(out, p["dc2_w"], p["dc2_b"]), p["bn2_g"], p["bn2_b"])
    out = jnp.tanh(deconv(out, p["dc3_w"], p["dc3_b"]))
    return out.reshape(B, 3, size[1], size[2])


if __name__ == "__main__":
    size = (3, 16, 16)     # (channels, H, W) -> H/8 = W/8 = 2
    dim = 8
    z_dim = 32
    B = 2

    key = jax.random.PRNGKey(0)
    kp, kz = jax.random.split(key)
    raw = init_params(kp, size, dim, z_dim)
    params = prepare_params(raw, size, dim)
    z = jax.random.normal(kz, (B, z_dim), jnp.float32)

    fwd = jax.jit(functools.partial(generator_forward, size=size, dim=dim))
    out = jax.block_until_ready(fwd(params, z))

    assert out.shape == (B, 3, size[1], size[2]), out.shape
    assert bool(jnp.all(jnp.isfinite(out)))

    # Correctness vs plain-JAX f32 reference (bf16 MXU/storage path => loose tol).
    ref = reference_forward(raw, z, size, dim)
    max_err = float(jnp.max(jnp.abs(out - ref)))
    assert max_err < 0.1, max_err

    print("KERNEL_OK")
</pallas_src>

<mosaic_0001>
module attributes {stable_mosaic.version = 11 : i64} {
  func.func @_linear_relu_kernel(%arg0: i32, %arg1: memref<2x32xbf16, #tpu.memory_space<vmem>>, %arg2: memref<32x128xbf16, #tpu.memory_space<vmem>>, %arg3: memref<1x128xf32, #tpu.memory_space<vmem>>, %arg4: memref<2x128xbf16, #tpu.memory_space<vmem>>) attributes {dimension_semantics = [#tpu.dimension_semantics<parallel>], iteration_bounds = array<i64: 1>, scalar_prefetch = 0 : i64, scratch_operands = 0 : i64, tpu.core_type = #tpu.core_type<tc>, window_params = [{pipeline_mode = #tpu.pipeline_mode<synchronous>, transform_indices = @transform_0, window_bounds = array<i64: 2, 32>}, {transform_indices = @transform_1, window_bounds = array<i64: 32, 128>}, {transform_indices = @transform_2, window_bounds = array<i64: 1, 128>}, {transform_indices = @transform_3, window_bounds = array<i64: 2, 128>}]} {
    %c0 = arith.constant 0 : index
    %c0_0 = arith.constant 0 : index
    %0 = vector.load %arg1[%c0, %c0_0] : memref<2x32xbf16, #tpu.memory_space<vmem>>, vector<2x32xbf16>
    %c0_1 = arith.constant 0 : index
    %c0_2 = arith.constant 0 : index
    %1 = vector.load %arg2[%c0_1, %c0_2] : memref<32x128xbf16, #tpu.memory_space<vmem>>, vector<32x128xbf16>
    %cst = arith.constant dense<0.000000e+00> : vector<2x128xf32>
    %2 = tpu.matmul %0, %1, %cst {dimension_numbers = #tpu.dot_dimension_numbers<[1], [0], [0], [1], [0, 0, 1, 1], [], []>} : vector<2x32xbf16>, vector<32x128xbf16>, vector<2x128xf32> -> vector<2x128xf32>
    %c0_3 = arith.constant 0 : index
    %c0_4 = arith.constant 0 : index
    %3 = vector.load %arg3[%c0_3, %c0_4] : memref<1x128xf32, #tpu.memory_space<vmem>>, vector<1x128xf32>
    %4 = vector.broadcast %3 : vector<1x128xf32> to vector<2x128xf32>
    %5 = arith.addf %2, %4 : vector<2x128xf32>
    %cst_5 = arith.constant 0.000000e+00 : f32
    %6 = vector.broadcast %cst_5 : f32 to vector<2x128xf32>
    %7 = arith.maximumf %5, %6 : vector<2x128xf32>
    %8 = arith.truncf %7 : vector<2x128xf32> to vector<2x128xbf16>
    %c0_6 = arith.constant 0 : index
    %c0_7 = arith.constant 0 : index
    %9 = vector.load %arg4[%c0_6, %c0_7] : memref<2x128xbf16, #tpu.memory_space<vmem>>, vector<2x128xbf16>
    tpu.vector_store %arg4[%c0_6, %c0_7], %8 {strides = array<i32>} : memref<2x128xbf16, #tpu.memory_space<vmem>>, vector<2x128xbf16>,
    return
  }
  func.func @transform_0(%arg0: i32) -> (i32, i32) {
    %c0_i32 = arith.constant 0 : i32
    %c0_i32_0 = arith.constant 0 : i32
    %c0_i32_1 = arith.constant 0 : i32
    return %c0_i32, %c0_i32_0 : i32, i32
  }
  func.func @transform_1(%arg0: i32) -> (i32, i32) {
    %c0_i32 = arith.constant 0 : i32
    %c0_i32_0 = arith.constant 0 : i32
    return %c0_i32, %arg0 : i32, i32
  }
  func.func @transform_2(%arg0: i32) -> (i32, i32) {
    %c0_i32 = arith.constant 0 : i32
    %c0_i32_0 = arith.constant 0 : i32
    return %c0_i32, %arg0 : i32, i32
  }
  func.func @transform_3(%arg0: i32) -> (i32, i32) {
    %c0_i32 = arith.constant 0 : i32
    %c0_i32_0 = arith.constant 0 : i32
    return %c0_i32, %arg0 : i32, i32
  }
}

module attributes {stable_mosaic.version = 11 : i64} {
  func.func @_deconv_block_kernel(%arg0: i32, %arg1: memref<8x32xbf16, #tpu.memory_space<vmem>>, %arg2: memref<1x32xf32, #tpu.memory_space<vmem>>, %arg3: memref<1x32xf32, #tpu.memory_space<vmem>>, %arg4: memref<32x64xbf16, #tpu.memory_space<vmem>>, %arg5: memref<1x64xf32, #tpu.memory_space<vmem>>, %arg6: memref<8x64xbf16, #tpu.memory_space<vmem>>, %arg7: memref<8x64xf32, #tpu.memory_space<vmem>>) attributes {dimension_semantics = [#tpu.dimension_semantics<parallel>], iteration_bounds = array<i64: 1>, scalar_prefetch = 0 : i64, scratch_operands = 0 : i64, tpu.core_type = #tpu.core_type<tc>, window_params = [{transform_indices = @transform_0, window_bounds = array<i64: 8, 32>}, {pipeline_mode = #tpu.pipeline_mode<synchronous>, transform_indices = @transform_1, window_bounds = array<i64: 1, 32>}, {pipeline_mode = #tpu.pipeline_mode<synchronous>, transform_indices = @transform_2, window_bounds = array<i64: 1, 32>}, {pipeline_mode = #tpu.pipeline_mode<synchronous>, transform_indices = @transform_3, window_bounds = array<i64: 32, 64>}, {pipeline_mode = #tpu.pipeline_mode<synchronous>, transform_indices = @transform_4, window_bounds = array<i64: 1, 64>}, {transform_indices = @transform_5, window_bounds = array<i64: 8, 64>}, {transform_indices = @transform_6, window_bounds = array<i64: 8, 64>}]} {
    %c0 = arith.constant 0 : index
    %c0_0 = arith.constant 0 : index
    %0 = vector.load %arg1[%c0, %c0_0] : memref<8x32xbf16, #tpu.memory_space<vmem>>, vector<8x32xbf16>
    %1 = arith.extf %0 : vector<8x32xbf16> to vector<8x32xf32>
    %c0_1 = arith.constant 0 : index
    %c0_2 = arith.constant 0 : index
    %2 = vector.load %arg2[%c0_1, %c0_2] : memref<1x32xf32, #tpu.memory_space<vmem>>, vector<1x32xf32>
    %3 = vector.broadcast %2 : vector<1x32xf32> to vector<8x32xf32>
    %4 = arith.mulf %1, %3 : vector<8x32xf32>
    %c0_3 = arith.constant 0 : index
    %c0_4 = arith.constant 0 : index
    %5 = vector.load %arg3[%c0_3, %c0_4] : memref<1x32xf32, #tpu.memory_space<vmem>>, vector<1x32xf32>
    %6 = vector.broadcast %5 : vector<1x32xf32> to vector<8x32xf32>
    %7 = arith.addf %4, %6 : vector<8x32xf32>
    %cst = arith.constant 0.000000e+00 : f32
    %8 = vector.broadcast %cst : f32 to vector<8x32xf32>
    %9 = arith.maximumf %7, %8 : vector<8x32xf32>
    %10 = arith.truncf %9 : vector<8x32xf32> to vector<8x32xbf16>
    %c0_5 = arith.constant 0 : index
    %c0_6 = arith.constant 0 : index
    %11 = vector.load %arg4[%c0_5, %c0_6] : memref<32x64xbf16, #tpu.memory_space<vmem>>, vector<32x64xbf16>
    %cst_7 = arith.constant dense<0.000000e+00> : vector<8x64xf32>
    %12 = tpu.matmul %10, %11, %cst_7 {dimension_numbers = #tpu.dot_dimension_numbers<[1], [0], [0], [1], [0, 0, 1, 1], [], []>} : vector<8x32xbf16>, vector<32x64xbf16>, vector<8x64xf32> -> vector<8x64xf32>
    %c0_8 = arith.constant 0 : index
    %c0_9 = arith.constant 0 : index
    %13 = vector.load %arg5[%c0_8, %c0_9] : memref<1x64xf32, #tpu.memory_space<vmem>>, vector<1x64xf32>
    %14 = vector.broadcast %13 : vector<1x64xf32> to vector<8x64xf32>
    %15 = arith.addf %12, %14 : vector<8x64xf32>
    %16 = arith.truncf %15 : vector<8x64xf32> to vector<8x64xbf16>
    %c0_10 = arith.constant 0 : index
    %c0_11 = arith.constant 0 : index
    %17 = vector.load %arg6[%c0_10, %c0_11] : memref<8x64xbf16, #tpu.memory_space<vmem>>, vector<8x64xbf16>
    tpu.vector_store %arg6[%c0_10, %c0_11], %16 {strides = array<i32>} : memref<8x64xbf16, #tpu.memory_space<vmem>>, vector<8x64xbf16>,
    %c8_i32 = arith.constant 8 : i32
    %18 = arith.muli %arg0, %c8_i32 : i32
    %19 = tpu.iota {dimensions = array<i32: 0>} : vector<8x1xi32>
    %20 = vector.broadcast %18 : i32 to vector<8x1xi32>
    %21 = arith.addi %20, %19 : vector<8x1xi32>
    %c8_i32_12 = arith.constant 8 : i32
    %22 = vector.broadcast %c8_i32_12 : i32 to vector<8x1xi32>
    %23 = arith.cmpi slt, %21, %22 : vector<8x1xi32>
    %24 = arith.extui %23 : vector<8x1xi1> to vector<8x1xi32>
    %25 = arith.sitofp %24 : vector<8x1xi32> to vector<8x1xf32>
    %26 = vector.broadcast %25 : vector<8x1xf32> to vector<8x64xf32>
    %27 = arith.mulf %15, %26 : vector<8x64xf32>
    %cst_13 = arith.constant dense<0.000000e+00> : vector<64xf32>
    %28 = vector.multi_reduction <add>, %27, %cst_13 [0] : vector<8x64xf32> to vector<64xf32>
    %29 = vector.shape_cast %28 : vector<64xf32> to vector<1x64xf32>
    %30 = arith.mulf %27, %27 : vector<8x64xf32>
    %cst_14 = arith.constant dense<0.000000e+00> : vector<64xf32>
    %31 = vector.multi_reduction <add>, %30, %cst_14 [0] : vector<8x64xf32> to vector<64xf32>
    %32 = vector.shape_cast %31 : vector<64xf32> to vector<1x64xf32>
    %33 = tpu.iota {dimensions = array<i32: 0>} : vector<8x1xi32>
    %c0_i32 = arith.constant 0 : i32
    %34 = vector.broadcast %c0_i32 : i32 to vector<8x1xi32>
    %35 = arith.cmpi eq, %33, %34 : vector<8x1xi32>
    %cst_15 = arith.constant 0.000000e+00 : f32
    %36 = vector.shape_cast %35 : vector<8x1xi1> to vector<8x1xi1>
    %37 = vector.broadcast %36 : vector<8x1xi1> to vector<8x64xi1>
    %38 = vector.shape_cast %29 : vector<1x64xf32> to vector<1x64xf32>
    %39 = vector.broadcast %38 : vector<1x64xf32> to vector<8x64xf32>
    %40 = vector.broadcast %cst_15 : f32 to vector<8x64xf32>
    %41 = arith.select %37, %39, %40 : vector<8x64xi1>, vector<8x64xf32>
    %c1_i32 = arith.constant 1 : i32
    %42 = vector.broadcast %c1_i32 : i32 to vector<8x1xi32>
    %43 = arith.cmpi eq, %33, %42 : vector<8x1xi32>
    %cst_16 = arith.constant 0.000000e+00 : f32
    %44 = vector.shape_cast %43 : vector<8x1xi1> to vector<8x1xi1>
    %45 = vector.broadcast %44 : vector<8x1xi1> to vector<8x64xi1>
    %46 = vector.shape_cast %32 : vector<1x64xf32> to vector<1x64xf32>
    %47 = vector.broadcast %46 : vector<1x64xf32> to vector<8x64xf32>
    %48 = vector.broadcast %cst_16 : f32 to vector<8x64xf32>
    %49 = arith.select %45, %47, %48 : vector<8x64xi1>, vector<8x64xf32>
    %50 = arith.addf %41, %49 : vector<8x64xf32>
    %c0_17 = arith.constant 0 : index
    %c0_18 = arith.constant 0 : index
    %51 = vector.load %arg7[%c0_17, %c0_18] : memref<8x64xf32, #tpu.memory_space<vmem>>, vector<8x64xf32>
    tpu.vector_store %arg7[%c0_17, %c0_18], %50 {strides = array<i32>} : memref<8x64xf32, #tpu.memory_space<vmem>>, vector<8x64xf32>,
    return
  }
  func.func @transform_0(%arg0: i32) -> (i32, i32) {
    %c0_i32 = arith.constant 0 : i32
    %c0_i32_0 = arith.constant 0 : i32
    return %arg0, %c0_i32 : i32, i32
  }
  func.func @transform_1(%arg0: i32) -> (i32, i32) {
    %c0_i32 = arith.constant 0 : i32
    %c0_i32_0 = arith.constant 0 : i32
    %c0_i32_1 = arith.constant 0 : i32
    return %c0_i32, %c0_i32_0 : i32, i32
  }
  func.func @transform_2(%arg0: i32) -> (i32, i32) {
    %c0_i32 = arith.constant 0 : i32
    %c0_i32_0 = arith.constant 0 : i32
    %c0_i32_1 = arith.constant 0 : i32
    return %c0_i32, %c0_i32_0 : i32, i32
  }
  func.func @transform_3(%arg0: i32) -> (i32, i32) {
    %c0_i32 = arith.constant 0 : i32
    %c0_i32_0 = arith.constant 0 : i32
    %c0_i32_1 = arith.constant 0 : i32
    return %c0_i32, %c0_i32_0 : i32, i32
  }
  func.func @transform_4(%arg0: i32) -> (i32, i32) {
    %c0_i32 = arith.constant 0 : i32
    %c0_i32_0 = arith.constant 0 : i32
    %c0_i32_1 = arith.constant 0 : i32
    return %c0_i32, %c0_i32_0 : i32, i32
  }
  func.func @transform_5(%arg0: i32) -> (i32, i32) {
    %c0_i32 = arith.constant 0 : i32
    %c0_i32_0 = arith.constant 0 : i32
    return %arg0, %c0_i32 : i32, i32
  }
  func.func @transform_6(%arg0: i32) -> (i32, i32) {
    %c0_i32 = arith.constant 0 : i32
    %c0_i32_0 = arith.constant 0 : i32
    return %arg0, %c0_i32 : i32, i32
  }
}

module attributes {stable_mosaic.version = 11 : i64} {
  func.func @_deconv_block_kernel(%arg0: i32, %arg1: memref<32x16xbf16, #tpu.memory_space<vmem>>, %arg2: memref<1x16xf32, #tpu.memory_space<vmem>>, %arg3: memref<1x16xf32, #tpu.memory_space<vmem>>, %arg4: memref<16x32xbf16, #tpu.memory_space<vmem>>, %arg5: memref<1x32xf32, #tpu.memory_space<vmem>>, %arg6: memref<32x32xbf16, #tpu.memory_space<vmem>>, %arg7: memref<8x32xf32, #tpu.memory_space<vmem>>) attributes {dimension_semantics = [#tpu.dimension_semantics<parallel>], iteration_bounds = array<i64: 1>, scalar_prefetch = 0 : i64, scratch_operands = 0 : i64, tpu.core_type = #tpu.core_type<tc>, window_params = [{transform_indices = @transform_0, window_bounds = array<i64: 32, 16>}, {pipeline_mode = #tpu.pipeline_mode<synchronous>, transform_indices = @transform_1, window_bounds = array<i64: 1, 16>}, {pipeline_mode = #tpu.pipeline_mode<synchronous>, transform_indices = @transform_2, window_bounds = array<i64: 1, 16>}, {pipeline_mode = #tpu.pipeline_mode<synchronous>, transform_indices = @transform_3, window_bounds = array<i64: 16, 32>}, {pipeline_mode = #tpu.pipeline_mode<synchronous>, transform_indices = @transform_4, window_bounds = array<i64: 1, 32>}, {transform_indices = @transform_5, window_bounds = array<i64: 32, 32>}, {transform_indices = @transform_6, window_bounds = array<i64: 8, 32>}]} {
    %c0 = arith.constant 0 : index
    %c0_0 = arith.constant 0 : index
    %0 = vector.load %arg1[%c0, %c0_0] : memref<32x16xbf16, #tpu.memory_space<vmem>>, vector<32x16xbf16>
    %1 = arith.extf %0 : vector<32x16xbf16> to vector<32x16xf32>
    %c0_1 = arith.constant 0 : index
    %c0_2 = arith.constant 0 : index
    %2 = vector.load %arg2[%c0_1, %c0_2] : memref<1x16xf32, #tpu.memory_space<vmem>>, vector<1x16xf32>
    %3 = vector.broadcast %2 : vector<1x16xf32> to vector<32x16xf32>
    %4 = arith.mulf %1, %3 : vector<32x16xf32>
    %c0_3 = arith.constant 0 : index
    %c0_4 = arith.constant 0 : index
    %5 = vector.load %arg3[%c0_3, %c0_4] : memref<1x16xf32, #tpu.memory_space<vmem>>, vector<1x16xf32>
    %6 = vector.broadcast %5 : vector<1x16xf32> to vector<32x16xf32>
    %7 = arith.addf %4, %6 : vector<32x16xf32>
    %cst = arith.constant 0.000000e+00 : f32
    %8 = vector.broadcast %cst : f32 to vector<32x16xf32>
    %9 = arith.maximumf %7, %8 : vector<32x16xf32>
    %10 = arith.truncf %9 : vector<32x16xf32> to vector<32x16xbf16>
    %c0_5 = arith.constant 0 : index
    %c0_6 = arith.constant 0 : index
    %11 = vector.load %arg4[%c0_5, %c0_6] : memref<16x32xbf16, #tpu.memory_space<vmem>>, vector<16x32xbf16>
    %cst_7 = arith.constant dense<0.000000e+00> : vector<32x32xf32>
    %12 = tpu.matmul %10, %11, %cst_7 {dimension_numbers = #tpu.dot_dimension_numbers<[1], [0], [0], [1], [0, 0, 1, 1], [], []>} : vector<32x16xbf16>, vector<16x32xbf16>, vector<32x32xf32> -> vector<32x32xf32>
    %c0_8 = arith.constant 0 : index
    %c0_9 = arith.constant 0 : index
    %13 = vector.load %arg5[%c0_8, %c0_9] : memref<1x32xf32, #tpu.memory_space<vmem>>, vector<1x32xf32>
    %14 = vector.broadcast %13 : vector<1x32xf32> to vector<32x32xf32>
    %15 = arith.addf %12, %14 : vector<32x32xf32>
    %16 = arith.truncf %15 : vector<32x32xf32> to vector<32x32xbf16>
    %c0_10 = arith.constant 0 : index
    %c0_11 = arith.constant 0 : index
    %17 = vector.load %arg6[%c0_10, %c0_11] : memref<32x32xbf16, #tpu.memory_space<vmem>>, vector<32x32xbf16>
    tpu.vector_store %arg6[%c0_10, %c0_11], %16 {strides = array<i32>} : memref<32x32xbf16, #tpu.memory_space<vmem>>, vector<32x32xbf16>,
    %c32_i32 = arith.constant 32 : i32
    %18 = arith.muli %arg0, %c32_i32 : i32
    %19 = tpu.iota {dimensions = array<i32: 0>} : vector<32x1xi32>
    %20 = vector.broadcast %18 : i32 to vector<32x1xi32>
    %21 = arith.addi %20, %19 : vector<32x1xi32>
    %c32_i32_12 = arith.constant 32 : i32
    %22 = vector.broadcast %c32_i32_12 : i32 to vector<32x1xi32>
    %23 = arith.cmpi slt, %21, %22 : vector<32x1xi32>
    %24 = arith.extui %23 : vector<32x1xi1> to vector<32x1xi32>
    %25 = arith.sitofp %24 : vector<32x1xi32> to vector<32x1xf32>
    %26 = vector.broadcast %25 : vector<32x1xf32> to vector<32x32xf32>
    %27 = arith.mulf %15, %26 : vector<32x32xf32>
    %cst_13 = arith.constant dense<0.000000e+00> : vector<32xf32>
    %28 = vector.multi_reduction <add>, %27, %cst_13 [0] : vector<32x32xf32> to vector<32xf32>
    %29 = vector.shape_cast %28 : vector<32xf32> to vector<1x32xf32>
    %30 = arith.mulf %27, %27 : vector<32x32xf32>
    %cst_14 = arith.constant dense<0.000000e+00> : vector<32xf32>
    %31 = vector.multi_reduction <add>, %30, %cst_14 [0] : vector<32x32xf32> to vector<32xf32>
    %32 = vector.shape_cast %31 : vector<32xf32> to vector<1x32xf32>
    %33 = tpu.iota {dimensions = array<i32: 0>} : vector<8x1xi32>
    %c0_i32 = arith.constant 0 : i32
    %34 = vector.broadcast %c0_i32 : i32 to vector<8x1xi32>
    %35 = arith.cmpi eq, %33, %34 : vector<8x1xi32>
    %cst_15 = arith.constant 0.000000e+00 : f32
    %36 = vector.shape_cast %35 : vector<8x1xi1> to vector<8x1xi1>
    %37 = vector.broadcast %36 : vector<8x1xi1> to vector<8x32xi1>
    %38 = vector.shape_cast %29 : vector<1x32xf32> to vector<1x32xf32>
    %39 = vector.broadcast %38 : vector<1x32xf32> to vector<8x32xf32>
    %40 = vector.broadcast %cst_15 : f32 to vector<8x32xf32>
    %41 = arith.select %37, %39, %40 : vector<8x32xi1>, vector<8x32xf32>
    %c1_i32 = arith.constant 1 : i32
    %42 = vector.broadcast %c1_i32 : i32 to vector<8x1xi32>
    %43 = arith.cmpi eq, %33, %42 : vector<8x1xi32>
    %cst_16 = arith.constant 0.000000e+00 : f32
    %44 = vector.shape_cast %43 : vector<8x1xi1> to vector<8x1xi1>
    %45 = vector.broadcast %44 : vector<8x1xi1> to vector<8x32xi1>
    %46 = vector.shape_cast %32 : vector<1x32xf32> to vector<1x32xf32>
    %47 = vector.broadcast %46 : vector<1x32xf32> to vector<8x32xf32>
    %48 = vector.broadcast %cst_16 : f32 to vector<8x32xf32>
    %49 = arith.select %45, %47, %48 : vector<8x32xi1>, vector<8x32xf32>
    %50 = arith.addf %41, %49 : vector<8x32xf32>
    %c0_17 = arith.constant 0 : index
    %c0_18 = arith.constant 0 : index
    %51 = vector.load %arg7[%c0_17, %c0_18] : memref<8x32xf32, #tpu.memory_space<vmem>>, vector<8x32xf32>
    tpu.vector_store %arg7[%c0_17, %c0_18], %50 {strides = array<i32>} : memref<8x32xf32, #tpu.memory_space<vmem>>, vector<8x32xf32>,
    return
  }
  func.func @transform_0(%arg0: i32) -> (i32, i32) {
    %c0_i32 = arith.constant 0 : i32
    %c0_i32_0 = arith.constant 0 : i32
    return %arg0, %c0_i32 : i32, i32
  }
  func.func @transform_1(%arg0: i32) -> (i32, i32) {
    %c0_i32 = arith.constant 0 : i32
    %c0_i32_0 = arith.constant 0 : i32
    %c0_i32_1 = arith.constant 0 : i32
    return %c0_i32, %c0_i32_0 : i32, i32
  }
  func.func @transform_2(%arg0: i32) -> (i32, i32) {
    %c0_i32 = arith.constant 0 : i32
    %c0_i32_0 = arith.constant 0 : i32
    %c0_i32_1 = arith.constant 0 : i32
    return %c0_i32, %c0_i32_0 : i32, i32
  }
  func.func @transform_3(%arg0: i32) -> (i32, i32) {
    %c0_i32 = arith.constant 0 : i32
    %c0_i32_0 = arith.constant 0 : i32
    %c0_i32_1 = arith.constant 0 : i32
    return %c0_i32, %c0_i32_0 : i32, i32
  }
  func.func @transform_4(%arg0: i32) -> (i32, i32) {
    %c0_i32 = arith.constant 0 : i32
    %c0_i32_0 = arith.constant 0 : i32
    %c0_i32_1 = arith.constant 0 : i32
    return %c0_i32, %c0_i32_0 : i32, i32
  }
  func.func @transform_5(%arg0: i32) -> (i32, i32) {
    %c0_i32 = arith.constant 0 : i32
    %c0_i32_0 = arith.constant 0 : i32
    return %arg0, %c0_i32 : i32, i32
  }
  func.func @transform_6(%arg0: i32) -> (i32, i32) {
    %c0_i32 = arith.constant 0 : i32
    %c0_i32_0 = arith.constant 0 : i32
    return %arg0, %c0_i32 : i32, i32
  }
}

module attributes {stable_mosaic.version = 11 : i64} {
  func.func @_deconv_block_kernel(%arg0: i32, %arg1: memref<128x8xbf16, #tpu.memory_space<vmem>>, %arg2: memref<1x8xf32, #tpu.memory_space<vmem>>, %arg3: memref<1x8xf32, #tpu.memory_space<vmem>>, %arg4: memref<8x12xbf16, #tpu.memory_space<vmem>>, %arg5: memref<1x12xf32, #tpu.memory_space<vmem>>, %arg6: memref<128x12xf32, #tpu.memory_space<vmem>>, %arg7: memref<8x12xf32, #tpu.memory_space<vmem>>) attributes {dimension_semantics = [#tpu.dimension_semantics<parallel>], iteration_bounds = array<i64: 1>, scalar_prefetch = 0 : i64, scratch_operands = 0 : i64, tpu.core_type = #tpu.core_type<tc>, window_params = [{transform_indices = @transform_0, window_bounds = array<i64: 128, 8>}, {pipeline_mode = #tpu.pipeline_mode<synchronous>, transform_indices = @transform_1, window_bounds = array<i64: 1, 8>}, {pipeline_mode = #tpu.pipeline_mode<synchronous>, transform_indices = @transform_2, window_bounds = array<i64: 1, 8>}, {pipeline_mode = #tpu.pipeline_mode<synchronous>, transform_indices = @transform_3, window_bounds = array<i64: 8, 12>}, {pipeline_mode = #tpu.pipeline_mode<synchronous>, transform_indices = @transform_4, window_bounds = array<i64: 1, 12>}, {transform_indices = @transform_5, window_bounds = array<i64: 128, 12>}, {transform_indices = @transform_6, window_bounds = array<i64: 8, 12>}]} {
    %c0 = arith.constant 0 : index
    %c0_0 = arith.constant 0 : index
    %0 = vector.load %arg1[%c0, %c0_0] : memref<128x8xbf16, #tpu.memory_space<vmem>>, vector<128x8xbf16>
    %1 = arith.extf %0 : vector<128x8xbf16> to vector<128x8xf32>
    %c0_1 = arith.constant 0 : index
    %c0_2 = arith.constant 0 : index
    %2 = vector.load %arg2[%c0_1, %c0_2] : memref<1x8xf32, #tpu.memory_space<vmem>>, vector<1x8xf32>
    %3 = vector.broadcast %2 : vector<1x8xf32> to vector<128x8xf32>
    %4 = arith.mulf %1, %3 : vector<128x8xf32>
    %c0_3 = arith.constant 0 : index
    %c0_4 = arith.constant 0 : index
    %5 = vector.load %arg3[%c0_3, %c0_4] : memref<1x8xf32, #tpu.memory_space<vmem>>, vector<1x8xf32>
    %6 = vector.broadcast %5 : vector<1x8xf32> to vector<128x8xf32>
    %7 = arith.addf %4, %6 : vector<128x8xf32>
    %cst = arith.constant 0.000000e+00 : f32
    %8 = vector.broadcast %cst : f32 to vector<128x8xf32>
    %9 = arith.maximumf %7, %8 : vector<128x8xf32>
    %10 = arith.truncf %9 : vector<128x8xf32> to vector<128x8xbf16>
    %c0_5 = arith.constant 0 : index
    %c0_6 = arith.constant 0 : index
    %11 = vector.load %arg4[%c0_5, %c0_6] : memref<8x12xbf16, #tpu.memory_space<vmem>>, vector<8x12xbf16>
    %cst_7 = arith.constant dense<0.000000e+00> : vector<128x12xf32>
    %12 = tpu.matmul %10, %11, %cst_7 {dimension_numbers = #tpu.dot_dimension_numbers<[1], [0], [0], [1], [0, 0, 1, 1], [], []>} : vector<128x8xbf16>, vector<8x12xbf16>, vector<128x12xf32> -> vector<128x12xf32>
    %c0_8 = arith.constant 0 : index
    %c0_9 = arith.constant 0 : index
    %13 = vector.load %arg5[%c0_8, %c0_9] : memref<1x12xf32, #tpu.memory_space<vmem>>, vector<1x12xf32>
    %14 = vector.broadcast %13 : vector<1x12xf32> to vector<128x12xf32>
    %15 = arith.addf %12, %14 : vector<128x12xf32>
    %16 = math.tanh %15 : vector<128x12xf32>
    %c0_10 = arith.constant 0 : index
    %c0_11 = arith.constant 0 : index
    %17 = vector.load %arg6[%c0_10, %c0_11] : memref<128x12xf32, #tpu.memory_space<vmem>>, vector<128x12xf32>
    tpu.vector_store %arg6[%c0_10, %c0_11], %16 {strides = array<i32>} : memref<128x12xf32, #tpu.memory_space<vmem>>, vector<128x12xf32>,
    %c128_i32 = arith.constant 128 : i32
    %18 = arith.muli %arg0, %c128_i32 : i32
    %19 = tpu.iota {dimensions = array<i32: 0>} : vector<128x1xi32>
    %20 = vector.broadcast %18 : i32 to vector<128x1xi32>
    %21 = arith.addi %20, %19 : vector<128x1xi32>
    %c128_i32_12 = arith.constant 128 : i32
    %22 = vector.broadcast %c128_i32_12 : i32 to vector<128x1xi32>
    %23 = arith.cmpi slt, %21, %22 : vector<128x1xi32>
    %24 = arith.extui %23 : vector<128x1xi1> to vector<128x1xi32>
    %25 = arith.sitofp %24 : vector<128x1xi32> to vector<128x1xf32>
    %26 = vector.broadcast %25 : vector<128x1xf32> to vector<128x12xf32>
    %27 = arith.mulf %16, %26 : vector<128x12xf32>
    %cst_13 = arith.constant dense<0.000000e+00> : vector<12xf32>
    %28 = vector.multi_reduction <add>, %27, %cst_13 [0] : vector<128x12xf32> to vector<12xf32>
    %29 = vector.shape_cast %28 : vector<12xf32> to vector<1x12xf32>
    %30 = arith.mulf %27, %27 : vector<128x12xf32>
    %cst_14 = arith.constant dense<0.000000e+00> : vector<12xf32>
    %31 = vector.multi_reduction <add>, %30, %cst_14 [0] : vector<128x12xf32> to vector<12xf32>
    %32 = vector.shape_cast %31 : vector<12xf32> to vector<1x12xf32>
    %33 = tpu.iota {dimensions = array<i32: 0>} : vector<8x1xi32>
    %c0_i32 = arith.constant 0 : i32
    %34 = vector.broadcast %c0_i32 : i32 to vector<8x1xi32>
    %35 = arith.cmpi eq, %33, %34 : vector<8x1xi32>
    %cst_15 = arith.constant 0.000000e+00 : f32
    %36 = vector.shape_cast %35 : vector<8x1xi1> to vector<8x1xi1>
    %37 = vector.broadcast %36 : vector<8x1xi1> to vector<8x12xi1>
    %38 = vector.shape_cast %29 : vector<1x12xf32> to vector<1x12xf32>
    %39 = vector.broadcast %38 : vector<1x12xf32> to vector<8x12xf32>
    %40 = vector.broadcast %cst_15 : f32 to vector<8x12xf32>
    %41 = arith.select %37, %39, %40 : vector<8x12xi1>, vector<8x12xf32>
    %c1_i32 = arith.constant 1 : i32
    %42 = vector.broadcast %c1_i32 : i32 to vector<8x1xi32>
    %43 = arith.cmpi eq, %33, %42 : vector<8x1xi32>
    %cst_16 = arith.constant 0.000000e+00 : f32
    %44 = vector.shape_cast %43 : vector<8x1xi1> to vector<8x1xi1>
    %45 = vector.broadcast %44 : vector<8x1xi1> to vector<8x12xi1>
    %46 = vector.shape_cast %32 : vector<1x12xf32> to vector<1x12xf32>
    %47 = vector.broadcast %46 : vector<1x12xf32> to vector<8x12xf32>
    %48 = vector.broadcast %cst_16 : f32 to vector<8x12xf32>
    %49 = arith.select %45, %47, %48 : vector<8x12xi1>, vector<8x12xf32>
    %50 = arith.addf %41, %49 : vector<8x12xf32>
    %c0_17 = arith.constant 0 : index
    %c0_18 = arith.constant 0 : index
    %51 = vector.load %arg7[%c0_17, %c0_18] : memref<8x12xf32, #tpu.memory_space<vmem>>, vector<8x12xf32>
    tpu.vector_store %arg7[%c0_17, %c0_18], %50 {strides = array<i32>} : memref<8x12xf32, #tpu.memory_space<vmem>>, vector<8x12xf32>,
    return
  }
  func.func @transform_0(%arg0: i32) -> (i32, i32) {
    %c0_i32 = arith.constant 0 : i32
    %c0_i32_0 = arith.constant 0 : i32
    return %arg0, %c0_i32 : i32, i32
  }
  func.func @transform_1(%arg0: i32) -> (i32, i32) {
    %c0_i32 = arith.constant 0 : i32
    %c0_i32_0 = arith.constant 0 : i32
    %c0_i32_1 = arith.constant 0 : i32
    return %c0_i32, %c0_i32_0 : i32, i32
  }
  func.func @transform_2(%arg0: i32) -> (i32, i32) {
    %c0_i32 = arith.constant 0 : i32
    %c0_i32_0 = arith.constant 0 : i32
    %c0_i32_1 = arith.constant 0 : i32
    return %c0_i32, %c0_i32_0 : i32, i32
  }
  func.func @transform_3(%arg0: i32) -> (i32, i32) {
    %c0_i32 = arith.constant 0 : i32
    %c0_i32_0 = arith.constant 0 : i32
    %c0_i32_1 = arith.constant 0 : i32
    return %c0_i32, %c0_i32_0 : i32, i32
  }
  func.func @transform_4(%arg0: i32) -> (i32, i32) {
    %c0_i32 = arith.constant 0 : i32
    %c0_i32_0 = arith.constant 0 : i32
    %c0_i32_1 = arith.constant 0 : i32
    return %c0_i32, %c0_i32_0 : i32, i32
  }
  func.func @transform_5(%arg0: i32) -> (i32, i32) {
    %c0_i32 = arith.constant 0 : i32
    %c0_i32_0 = arith.constant 0 : i32
    return %arg0, %c0_i32 : i32, i32
  }
  func.func @transform_6(%arg0: i32) -> (i32, i32) {
    %c0_i32 = arith.constant 0 : i32
    %c0_i32_0 = arith.constant 0 : i32
    return %arg0, %c0_i32 : i32, i32
  }
}

</mosaic_0001>

<llo_original>
// kernel: generator_forward.4
$region0: #{generator_forward.4}
  #allocation0 [shape = 'u32[]', space=smem, size = 0x4, offset = 0x4, fixed_abs, tag = 'smem constant byte address 0x4 - core index']
  #allocation1 [shape = 'u32[144,128]{1,0:T(1,128)}', space=vmem, size = 0x12000, scoped, tag = 'internal scratch']
  %s0 = inlined_call_operand.vmem [shape: bf16[2,32], index: 0, kind: input, shape index: {}]
  %s1 = inlined_call_operand.vmem [shape: bf16[32,128], index: 1, kind: input, shape index: {}]
  %s2 = inlined_call_operand.vmem [shape: f32[1,128], index: 2, kind: input, shape index: {}]
  %s3 = inlined_call_operand.vmem [shape: bf16[2,128], index: 3, kind: output, shape index: {}]
  %s4 = sld [smem:[#allocation0]]
  $region22: #{generator_forward.4} parent=0
    _
  %s6 = ssub.s32 1, %s4
  %s7 = scalar_select 0, %s6, %s4
  // Predicated region
  $region2: #{generator_forward.4} parent=0 // pred_check
    _
  $region3: #{generator_forward.4} parent=0 // pred_check_branch
    %9 = sbr.rel (0) target = $region5
  $region4: #{generator_forward.4} parent=0 // pred_region
    _
  $region5: #{generator_forward.4} parent=0 // pred_fallthru
    _
  // Predicated region
  $region6: #{generator_forward.4} parent=0 // pred_check
    _
  $region7: #{generator_forward.4} parent=0 // pred_check_branch
    %11 = sbr.rel (0) target = $region9
  $region8: #{generator_forward.4} parent=0 // pred_region
    _
  $region9: #{generator_forward.4} parent=0 // pred_fallthru
    _
  // Predicated region
  $region10: #{generator_forward.4} parent=0 // pred_check
    _
  $region11: #{generator_forward.4} parent=0 // pred_check_branch
    %13 = sbr.rel (0) target = $region13
  $region12: #{generator_forward.4} parent=0 // pred_region
    _
  $region13: #{generator_forward.4} parent=0 // pred_fallthru
    _
  %v15 = vld [vmem:[%s0] sm:$0x1]
  %v16 = vld [vmem:[%s1] sm:$0xf]
  %v17 = vld [vmem:[%s1 + $0x4] sm:$0xf]
  %v18 = vld [vmem:[%s1 + $0x8] sm:$0xf]
  %v19 = vld [vmem:[%s1 + $0xc] sm:$0xf]
  %v20 = vld [vmem:[%s2] sm:$0x1]
  %v22 = vlaneseq
  %v23 = vshrl.u32 %v22, 7
  %v24 = vsub.s32 0, %v23
  %v25 = vrot.slane %v20, %v24
  %v31 = vunpack.c.l.b16 %v16
  %v32 = vunpack.c.l.b16 %v17
  %v33 = vunpack.c.l.b16 %v18
  %v34 = vunpack.c.l.b16 %v19
  %v35 = vpack.c.b16 %v32, %v31
  %v36 = vpack.c.b16 %v34, %v33
  %vm39 = vcmask 261120
  %v41 = vsel %vm39, %v15, 0
  %43 = vmatprep.subr.bf16.mxu0 0
  %44 = vmatpush1.bf16.msra.mxu0 %v35
  %45 = vmatprep.subr.bf16.mxu0 0
  %46 = vmatpush1.bf16.msra.mxu0 %v36
  %47 = vmatprep.subr.bf16.mxu0 0
  %48 = vmatpush1.bf16.msra.mxu0 0
  %49 = vmatprep.subr.bf16.mxu0 0
  %50 = vmatpush1.bf16.msra.mxu0 0
  %51 = vmatprep.subr.bf16.mxu0 0
  %52 = vmatpush1.bf16.msra.mxu0 0
  %53 = vmatprep.subr.bf16.mxu0 0
  %54 = vmatpush1.bf16.msra.mxu0 0
  %55 = vmatprep.subr.bf16.mxu0 0
  %56 = vmatpush1.bf16.msra.mxu0 0
  %57 = vmatprep.subr.bf16.mxu0 0
  %58 = vmatpush1.bf16.msra.mxu0 0
  %59 = vmatprep.subr.bf16.mxu0 0
  %60 = vmatpush1.bf16.msra.mxu0 0
  %61 = vmatprep.subr.bf16.mxu0 0
  %62 = vmatpush1.bf16.msra.mxu0 0
  %63 = vmatprep.subr.bf16.mxu0 0
  %64 = vmatpush1.bf16.msra.mxu0 0
  %65 = vmatprep.subr.bf16.mxu0 0
  %66 = vmatpush1.bf16.msra.mxu0 0
  %67 = vmatprep.subr.bf16.mxu0 0
  %68 = vmatpush1.bf16.msra.mxu0 0
  %69 = vmatprep.subr.bf16.mxu0 0
  %70 = vmatpush1.bf16.msra.mxu0 0
  %71 = vmatprep.subr.bf16.mxu0 0
  %72 = vmatpush1.bf16.msra.mxu0 0
  %73 = vmatprep.subr.bf16.mxu0 0
  %74 = vmatpush1.bf16.msra.mxu0 0
  %75 = vmatprep.mubr.bf16.mxu0 0
  %76 = vmatmul.mubr.bf16.gmra.mrb[0].mxu0 %v41
  %v77 = vpop.f32.mrb[0].mxu0
  %v78 = vadd.f32 %v25, %v77
  %v79 = vpop.f32.mrb[0].mxu0
  %v80 = vpop.f32.mrb[0].mxu0
  %v81 = vpop.f32.mrb[0].mxu0
  %82 = vdwg.mxu0
  %v83 = vmax.f32 %v78, 0.0
  %v84 = vpack.c.bf16 %v83, %v83
  %85 = vst [vmem:[%s3] sm:$0x1] %v84
  // Predicated region
  $region14: #{generator_forward.4} parent=0 // pred_check
    _
  $region15: #{generator_forward.4} parent=0 // pred_check_branch
    %87 = sbr.rel (0) target = $region17
  $region16: #{generator_forward.4} parent=0 // pred_region
    _
  $region17: #{generator_forward.4} parent=0 // pred_fallthru
    _
  // Predicated region
  $region18: #{generator_forward.4} parent=0 // pred_check
    _
  $region19: #{generator_forward.4} parent=0 // pred_check_branch
    %89 = sbr.rel (0) target = $region21
  $region20: #{generator_forward.4} parent=0 // pred_region
    _
  $region21: #{generator_forward.4} parent=0 // pred_fallthru
    _

// kernel: generator_forward.5
$region0: #{generator_forward.5}
  #allocation0 [shape = 'u32[]', space=smem, size = 0x4, offset = 0x4, fixed_abs, tag = 'smem constant byte address 0x4 - core index']
  #allocation1 [shape = 'u32[144,128]{1,0:T(1,128)}', space=vmem, size = 0x12000, scoped, tag = 'internal scratch']
  %s0 = inlined_call_operand.vmem [shape: bf16[8,32], index: 0, kind: input, shape index: {}]
  %s1 = inlined_call_operand.vmem [shape: f32[1,32], index: 1, kind: input, shape index: {}]
  %s2 = inlined_call_operand.vmem [shape: f32[1,32], index: 2, kind: input, shape index: {}]
  %s3 = inlined_call_operand.vmem [shape: bf16[32,64], index: 3, kind: input, shape index: {}]
  %s4 = inlined_call_operand.vmem [shape: f32[1,64], index: 4, kind: input, shape index: {}]
  %s5 = inlined_call_operand.vmem [shape: bf16[8,64], index: 5, kind: output, shape index: {0}]
  %s6 = inlined_call_operand.vmem [shape: f32[8,64], index: 6, kind: output, shape index: {1}]
  %7 = xla_tuple %s5, %s6
  %s8 = sld [smem:[#allocation0]]
  $region38: #{generator_forward.5} parent=0
    _
  %s10 = ssub.s32 1, %s8
  %s11 = scalar_select 0, %s10, %s8
  // Predicated region
  $region2: #{generator_forward.5} parent=0 // pred_check
    _
  $region3: #{generator_forward.5} parent=0 // pred_check_branch
    %13 = sbr.rel (0) target = $region5
  $region4: #{generator_forward.5} parent=0 // pred_region
    _
  $region5: #{generator_forward.5} parent=0 // pred_fallthru
    _
  // Predicated region
  $region6: #{generator_forward.5} parent=0 // pred_check
    _
  $region7: #{generator_forward.5} parent=0 // pred_check_branch
    %15 = sbr.rel (0) target = $region9
  $region8: #{generator_forward.5} parent=0 // pred_region
    _
  $region9: #{generator_forward.5} parent=0 // pred_fallthru
    _
  // Predicated region
  $region10: #{generator_forward.5} parent=0 // pred_check
    _
  $region11: #{generator_forward.5} parent=0 // pred_check_branch
    %17 = sbr.rel (0) target = $region13
  $region12: #{generator_forward.5} parent=0 // pred_region
    _
  $region13: #{generator_forward.5} parent=0 // pred_fallthru
    _
  // Predicated region
  $region14: #{generator_forward.5} parent=0 // pred_check
    _
  $region15: #{generator_forward.5} parent=0 // pred_check_branch
    %19 = sbr.rel (0) target = $region17
  $region16: #{generator_forward.5} parent=0 // pred_region
    _
  $region17: #{generator_forward.5} parent=0 // pred_fallthru
    _
  // Predicated region
  $region18: #{generator_forward.5} parent=0 // pred_check
    _
  $region19: #{generator_forward.5} parent=0 // pred_check_branch
    %21 = sbr.rel (0) target = $region21
  $region20: #{generator_forward.5} parent=0 // pred_region
    _
  $region21: #{generator_forward.5} parent=0 // pred_fallthru
    _
  %v23 = vld [vmem:[%s0] sm:$0xf]
  %v24 = vunpack.c.l.bf16 %v23
  %v25 = vld [vmem:[%s1] sm:$0x1]
  %v27 = vlaneseq
  %v28 = vshrl.u32 %v27, 7
  %v29 = vsub.s32 0, %v28
  %v30 = vrot.slane %v25, %v29
  %v32 = vmul.f32 %v24, %v30
  %v33 = vld [vmem:[%s2] sm:$0x1]
  %v35 = vlaneseq
  %v36 = vshrl.u32 %v35, 7
  %v37 = vsub.s32 0, %v36
  %v38 = vrot.slane %v33, %v37
  %v40 = vadd.f32 %v32, %v38
  %v41 = vmax.f32 %v40, 0.0
  %v42 = vpack.c.bf16 %v41, %v41
  %v43 = vld [vmem:[%s3] sm:$0xf]
  %v44 = vld [vmem:[%s3 + $0x4] sm:$0xf]
  %v45 = vld [vmem:[%s3 + $0x8] sm:$0xf]
  %v46 = vld [vmem:[%s3 + $0xc] sm:$0xf]
  %v47 = vld [vmem:[%s4] sm:$0x1]
  %v49 = vlaneseq
  %v50 = vshrl.u32 %v49, 7
  %v51 = vsub.s32 0, %v50
  %v52 = vrot.slane %v47, %v51
  %v58 = vunpack.c.l.b16 %v43
  %v59 = vunpack.c.l.b16 %v44
  %v60 = vunpack.c.l.b16 %v45
  %v61 = vunpack.c.l.b16 %v46
  %v62 = vpack.c.b16 %v59, %v58
  %v63 = vpack.c.b16 %v61, %v60
  %vm66 = vcmask 261120
  %v68 = vsel %vm66, %v42, 0
  %70 = vmatprep.subr.bf16.mxu0 0
  %71 = vmatpush1.bf16.msra.mxu0 %v62
  %72 = vmatprep.subr.bf16.mxu0 0
  %73 = vmatpush1.bf16.msra.mxu0 %v63
  %74 = vmatprep.subr.bf16.mxu0 0
  %75 = vmatpush1.bf16.msra.mxu0 0
  %76 = vmatprep.subr.bf16.mxu0 0
  %77 = vmatpush1.bf16.msra.mxu0 0
  %78 = vmatprep.subr.bf16.mxu0 0
  %79 = vmatpush1.bf16.msra.mxu0 0
  %80 = vmatprep.subr.bf16.mxu0 0
  %81 = vmatpush1.bf16.msra.mxu0 0
  %82 = vmatprep.subr.bf16.mxu0 0
  %83 = vmatpush1.bf16.msra.mxu0 0
  %84 = vmatprep.subr.bf16.mxu0 0
  %85 = vmatpush1.bf16.msra.mxu0 0
  %86 = vmatprep.subr.bf16.mxu0 0
  %87 = vmatpush1.bf16.msra.mxu0 0
  %88 = vmatprep.subr.bf16.mxu0 0
  %89 = vmatpush1.bf16.msra.mxu0 0
  %90 = vmatprep.subr.bf16.mxu0 0
  %91 = vmatpush1.bf16.msra.mxu0 0
  %92 = vmatprep.subr.bf16.mxu0 0
  %93 = vmatpush1.bf16.msra.mxu0 0
  %94 = vmatprep.subr.bf16.mxu0 0
  %95 = vmatpush1.bf16.msra.mxu0 0
  %96 = vmatprep.subr.bf16.mxu0 0
  %97 = vmatpush1.bf16.msra.mxu0 0
  %98 = vmatprep.subr.bf16.mxu0 0
  %99 = vmatpush1.bf16.msra.mxu0 0
  %100 = vmatprep.subr.bf16.mxu0 0
  %101 = vmatpush1.bf16.msra.mxu0 0
  %102 = vmatprep.mubr.bf16.mxu0 0
  %103 = vmatmul.mubr.bf16.gmra.mrb[0].mxu0 %v68
  %v104 = vpop.f32.mrb[0].mxu0
  %v105 = vadd.f32 %v52, %v104
  %v106 = vpop.f32.mrb[0].mxu0
  %v107 = vpop.f32.mrb[0].mxu0
  %v108 = vpop.f32.mrb[0].mxu0
  %109 = vdwg.mxu0
  %v110 = vpack.c.bf16 %v105, %v105
  %vm111 = vcmask 519168
  %112 = vst.msk [vmem:[%s5] sm:$0xf] %vm111, %v110
  %s113 = smul.u32 0, 8
  %v114 = vlaneseq
  %v115 = vshrl.u32 %v114, 7
  %v116 = vstv %s113
  %v117 = vadd.s32 %v116, %v115
  %vm118 = vcmp.lt.s32.totalorder %v117, 8
  %v119 = vsel %vm118, 1, 0
  %v120 = vcvt.s32.f32 %v119
  %v121 = vmul.f32 %v105, %v120
  %vm122 = vcmask 523264
  %v123 = vsel %vm122, %v121, 0.0
  %v124 = vrot.slane %v123, 4
  %v125 = vadd.f32 %v123, %v124
  %v126 = vrot.slane %v125, 2
  %v127 = vadd.f32 %v125, %v126
  %v128 = vrot.slane %v127, 1
  %v129 = vadd.f32 %v127, %v128
  %v130 = vmul.f32 %v121, %v121
  %v131 = vsel %vm122, %v130, 0.0
  %v132 = vrot.slane %v131, 4
  %v133 = vadd.f32 %v131, %v132
  %v134 = vrot.slane %v133, 2
  %v135 = vadd.f32 %v133, %v134
  %v136 = vrot.slane %v135, 1
  %v137 = vadd.f32 %v135, %v136
  %vm138 = vcmp.eq.s32.totalorder %v115, 0
  %v139 = vsel %vm138, 1, 0
  %vm140 = vcmp.eq.s32.totalorder %v139, 1
  %v141 = vsel %vm140, %v129, 0.0
  %vm142 = vcmp.eq.s32.totalorder %v115, 1
  %v143 = vsel %vm142, 1, 0
  %vm144 = vcmp.eq.s32.totalorder %v143, 1
  %v145 = vsel %vm144, %v137, 0.0
  %v146 = vadd.f32 %v141, %v145
  %147 = vst.msk [vmem:[%s6] sm:$0xff] %vm122, %v146
  // Predicated region
  $region22: #{generator_forward.5} parent=0 // pred_check
    _
  $region23: #{generator_forward.5} parent=0 // pred_check_branch
    %149 = sbr.rel (0) target = $region25
  $region24: #{generator_forward.5} parent=0 // pred_region
    _
  $region25: #{generator_forward.5} parent=0 // pred_fallthru
    _
  // Predicated region
  $region26: #{generator_forward.5} parent=0 // pred_check
    _
  $region27: #{generator_forward.5} parent=0 // pred_check_branch
    %151 = sbr.rel (0) target = $region29
  $region28: #{generator_forward.5} parent=0 // pred_region
    _
  $region29: #{generator_forward.5} parent=0 // pred_fallthru
    _
  // Predicated region
  $region30: #{generator_forward.5} parent=0 // pred_check
    _
  $region31: #{generator_forward.5} parent=0 // pred_check_branch
    %153 = sbr.rel (0) target = $region33
  $region32: #{generator_forward.5} parent=0 // pred_region
    _
  $region33: #{generator_forward.5} parent=0 // pred_fallthru
    _
  // Predicated region
  $region34: #{generator_forward.5} parent=0 // pred_check
    _
  $region35: #{generator_forward.5} parent=0 // pred_check_branch
    %155 = sbr.rel (0) target = $region37
  $region36: #{generator_forward.5} parent=0 // pred_region
    _
  $region37: #{generator_forward.5} parent=0 // pred_fallthru
    _

// kernel: generator_forward.6
$region0: #{generator_forward.6}
  #allocation0 [shape = 'u32[]', space=smem, size = 0x4, offset = 0x4, fixed_abs, tag = 'smem constant byte address 0x4 - core index']
  #allocation1 [shape = 'u32[144,128]{1,0:T(1,128)}', space=vmem, size = 0x12000, scoped, tag = 'internal scratch']
  %s0 = inlined_call_operand.vmem [shape: bf16[32,16], index: 0, kind: input, shape index: {}]
  %s1 = inlined_call_operand.vmem [shape: f32[1,16], index: 1, kind: input, shape index: {}]
  %s2 = inlined_call_operand.vmem [shape: f32[1,16], index: 2, kind: input, shape index: {}]
  %s3 = inlined_call_operand.vmem [shape: bf16[16,32], index: 3, kind: input, shape index: {}]
  %s4 = inlined_call_operand.vmem [shape: f32[1,32], index: 4, kind: input, shape index: {}]
  %s5 = inlined_call_operand.vmem [shape: bf16[32,32], index: 5, kind: output, shape index: {0}]
  %s6 = inlined_call_operand.vmem [shape: f32[8,32], index: 6, kind: output, shape index: {1}]
  %7 = xla_tuple %s5, %s6
  %s8 = sld [smem:[#allocation0]]
  $region38: #{generator_forward.6} parent=0
    _
  %s10 = ssub.s32 1, %s8
  %s11 = scalar_select 0, %s10, %s8
  // Predicated region
  $region2: #{generator_forward.6} parent=0 // pred_check
    _
  $region3: #{generator_forward.6} parent=0 // pred_check_branch
    %13 = sbr.rel (0) target = $region5
  $region4: #{generator_forward.6} parent=0 // pred_region
    _
  $region5: #{generator_forward.6} parent=0 // pred_fallthru
    _
  // Predicated region
  $region6: #{generator_forward.6} parent=0 // pred_check
    _
  $region7: #{generator_forward.6} parent=0 // pred_check_branch
    %15 = sbr.rel (0) target = $region9
  $region8: #{generator_forward.6} parent=0 // pred_region
    _
  $region9: #{generator_forward.6} parent=0 // pred_fallthru
    _
  // Predicated region
  $region10: #{generator_forward.6} parent=0 // pred_check
    _
  $region11: #{generator_forward.6} parent=0 // pred_check_branch
    %17 = sbr.rel (0) target = $region13
  $region12: #{generator_forward.6} parent=0 // pred_region
    _
  $region13: #{generator_forward.6} parent=0 // pred_fallthru
    _
  // Predicated region
  $region14: #{generator_forward.6} parent=0 // pred_check
    _
  $region15: #{generator_forward.6} parent=0 // pred_check_branch
    %19 = sbr.rel (0) target = $region17
  $region16: #{generator_forward.6} parent=0 // pred_region
    _
  $region17: #{generator_forward.6} parent=0 // pred_fallthru
    _
  // Predicated region
  $region18: #{generator_forward.6} parent=0 // pred_check
    _
  $region19: #{generator_forward.6} parent=0 // pred_check_branch
    %21 = sbr.rel (0) target = $region21
  $region20: #{generator_forward.6} parent=0 // pred_region
    _
  $region21: #{generator_forward.6} parent=0 // pred_fallthru
    _
  %v23 = vld [vmem:[%s0] sm:$0xf]
  %v24 = vld [vmem:[%s0 + $0x4] sm:$0xf]
  %v25 = vld [vmem:[%s0 + $0x8] sm:$0xf]
  %v26 = vld [vmem:[%s0 + $0xc] sm:$0xf]
  %v27 = vunpack.c.l.bf16 %v23
  %v28 = vunpack.c.l.bf16 %v24
  %v29 = vunpack.c.l.bf16 %v25
  %v30 = vunpack.c.l.bf16 %v26
  %v31 = vld [vmem:[%s1] sm:$0x1]
  %v33 = vlaneseq
  %v34 = vshrl.u32 %v33, 7
  %v35 = vsub.s32 0, %v34
  %v36 = vrot.slane %v31, %v35
  %v38 = vmul.f32 %v27, %v36
  %v39 = vmul.f32 %v28, %v36
  %v40 = vmul.f32 %v29, %v36
  %v41 = vmul.f32 %v30, %v36
  %v42 = vld [vmem:[%s2] sm:$0x1]
  %v44 = vlaneseq
  %v45 = vshrl.u32 %v44, 7
  %v46 = vsub.s32 0, %v45
  %v47 = vrot.slane %v42, %v46
  %v49 = vadd.f32 %v38, %v47
  %v50 = vadd.f32 %v39, %v47
  %v51 = vadd.f32 %v40, %v47
  %v52 = vadd.f32 %v41, %v47
  %v53 = vmax.f32 %v49, 0.0
  %v54 = vmax.f32 %v50, 0.0
  %v55 = vmax.f32 %v51, 0.0
  %v56 = vmax.f32 %v52, 0.0
  %v57 = vpack.c.bf16 %v54, %v53
  %v58 = vpack.c.bf16 %v56, %v55
  %v59 = vld [vmem:[%s3] sm:$0xf]
  %v60 = vld [vmem:[%s3 + $0x4] sm:$0xf]
  %v61 = vld [vmem:[%s4] sm:$0x1]
  %v63 = vlaneseq
  %v64 = vshrl.u32 %v63, 7
  %v65 = vsub.s32 0, %v64
  %v66 = vrot.slane %v61, %v65
  %v70 = vunpack.c.l.b16 %v59
  %v71 = vunpack.c.l.b16 %v60
  %v72 = vpack.c.b16 %v71, %v70
  %vm74 = vcmask 130048
  %v76 = vsel %vm74, %v57, 0
  %v79 = vsel %vm74, %v58, 0
  %81 = vmatprep.subr.bf16.mxu0 0
  %82 = vmatpush1.bf16.msra.mxu0 %v72
  %83 = vmatprep.subr.bf16.mxu0 0
  %84 = vmatpush1.bf16.msra.mxu0 0
  %85 = vmatprep.subr.bf16.mxu0 0
  %86 = vmatpush1.bf16.msra.mxu0 0
  %87 = vmatprep.subr.bf16.mxu0 0
  %88 = vmatpush1.bf16.msra.mxu0 0
  %89 = vmatprep.subr.bf16.mxu0 0
  %90 = vmatpush1.bf16.msra.mxu0 0
  %91 = vmatprep.subr.bf16.mxu0 0
  %92 = vmatpush1.bf16.msra.mxu0 0
  %93 = vmatprep.subr.bf16.mxu0 0
  %94 = vmatpush1.bf16.msra.mxu0 0
  %95 = vmatprep.subr.bf16.mxu0 0
  %96 = vmatpush1.bf16.msra.mxu0 0
  %97 = vmatprep.subr.bf16.mxu0 0
  %98 = vmatpush1.bf16.msra.mxu0 0
  %99 = vmatprep.subr.bf16.mxu0 0
  %100 = vmatpush1.bf16.msra.mxu0 0
  %101 = vmatprep.subr.bf16.mxu0 0
  %102 = vmatpush1.bf16.msra.mxu0 0
  %103 = vmatprep.subr.bf16.mxu0 0
  %104 = vmatpush1.bf16.msra.mxu0 0
  %105 = vmatprep.subr.bf16.mxu0 0
  %106 = vmatpush1.bf16.msra.mxu0 0
  %107 = vmatprep.subr.bf16.mxu0 0
  %108 = vmatpush1.bf16.msra.mxu0 0
  %109 = vmatprep.subr.bf16.mxu0 0
  %110 = vmatpush1.bf16.msra.mxu0 0
  %111 = vmatprep.subr.bf16.mxu0 0
  %112 = vmatpush1.bf16.msra.mxu0 0
  %113 = vmatprep.mubr.bf16.mxu0 0
  %114 = vmatmul.mubr.bf16.gmra.mrb[0].mxu0 %v76
  %v115 = vpop.f32.mrb[0].mxu0
  %v116 = vadd.f32 %v66, %v115
  %v117 = vpop.f32.mrb[0].mxu0
  %v118 = vpop.f32.mrb[0].mxu0
  %v119 = vadd.f32 %v66, %v118
  %v120 = vpop.f32.mrb[0].mxu0
  %121 = vmatprep.mubr.bf16.mxu0 0
  %122 = vmatmul.mubr.bf16.gmra.mrb[0].mxu0 %v79
  %v123 = vpop.f32.mrb[0].mxu0
  %v124 = vadd.f32 %v66, %v123
  %v125 = vpop.f32.mrb[0].mxu0
  %v126 = vpop.f32.mrb[0].mxu0
  %v127 = vadd.f32 %v66, %v126
  %v128 = vpop.f32.mrb[0].mxu0
  %129 = vdwg.mxu0
  %v130 = vpack.c.bf16 %v119, %v116
  %v131 = vpack.c.bf16 %v127, %v124
  %v134 = vunpack.c.l.b16 %v130
  %v135 = vunpack.c.h.b16 %v130
  %v136 = vunpack.c.l.b16 %v131
  %v137 = vunpack.c.h.b16 %v131
  %v138 = vpack.c.b16 %v134, %v134
  %v139 = vpack.c.b16 %v135, %v135
  %v140 = vpack.c.b16 %v136, %v136
  %v141 = vpack.c.b16 %v137, %v137
  %vm146 = vcmask 257024
  %147 = vst.msk [vmem:[%s5] sm:$0xf] %vm146, %v138
  %148 = vst.msk [vmem:[%s5 + $0x4] sm:$0xf] %vm146, %v139
  %149 = vst.msk [vmem:[%s5 + $0x8] sm:$0xf] %vm146, %v140
  %150 = vst.msk [vmem:[%s5 + $0xc] sm:$0xf] %vm146, %v141
  %s151 = smul.u32 0, 32
  %v152 = vlaneseq
  %v153 = vshrl.u32 %v152, 7
  %v154 = vadd.s32 %v153, 8
  %v155 = vadd.s32 %v153, 16
  %v156 = vadd.s32 %v153, 24
  %v157 = vstv %s151
  %v158 = vadd.s32 %v157, %v153
  %v159 = vadd.s32 %v157, %v154
  %v160 = vadd.s32 %v157, %v155
  %v161 = vadd.s32 %v157, %v156
  %vm162 = vcmp.lt.s32.totalorder %v158, 32
  %vm163 = vcmp.lt.s32.totalorder %v159, 32
  %vm164 = vcmp.lt.s32.totalorder %v160, 32
  %vm165 = vcmp.lt.s32.totalorder %v161, 32
  %v166 = vsel %vm162, 1, 0
  %v167 = vsel %vm163, 1, 0
  %v168 = vsel %vm164, 1, 0
  %v169 = vsel %vm165, 1, 0
  %v170 = vcvt.s32.f32 %v166
  %v171 = vcvt.s32.f32 %v167
  %v172 = vcvt.s32.f32 %v168
  %v173 = vcvt.s32.f32 %v169
  %v174 = vmul.f32 %v116, %v170
  %v175 = vmul.f32 %v119, %v171
  %v176 = vmul.f32 %v124, %v172
  %v177 = vmul.f32 %v127, %v173
  %vm178 = vcmask 261120
  %v179 = vsel %vm178, %v174, 0.0
  %v180 = vsel %vm178, %v175, 0.0
  %v181 = vadd.f32 %v179, %v180
  %v182 = vsel %vm178, %v176, 0.0
  %v183 = vadd.f32 %v181, %v182
  %v184 = vsel %vm178, %v177, 0.0
  %v185 = vadd.f32 %v183, %v184
  %v186 = vrot.slane %v185, 4
  %v187 = vadd.f32 %v185, %v186
  %v188 = vrot.slane %v187, 2
  %v189 = vadd.f32 %v187, %v188
  %v190 = vrot.slane %v189, 1
  %v191 = vadd.f32 %v189, %v190
  %v192 = vmul.f32 %v174, %v174
  %v193 = vmul.f32 %v175, %v175
  %v194 = vmul.f32 %v176, %v176
  %v195 = vmul.f32 %v177, %v177
  %v196 = vsel %vm178, %v192, 0.0
  %v197 = vsel %vm178, %v193, 0.0
  %v198 = vadd.f32 %v196, %v197
  %v199 = vsel %vm178, %v194, 0.0
  %v200 = vadd.f32 %v198, %v199
  %v201 = vsel %vm178, %v195, 0.0
  %v202 = vadd.f32 %v200, %v201
  %v203 = vrot.slane %v202, 4
  %v204 = vadd.f32 %v202, %v203
  %v205 = vrot.slane %v204, 2
  %v206 = vadd.f32 %v204, %v205
  %v207 = vrot.slane %v206, 1
  %v208 = vadd.f32 %v206, %v207
  %vm209 = vcmp.eq.s32.totalorder %v153, 0
  %v210 = vsel %vm209, 1, 0
  %vm211 = vcmp.eq.s32.totalorder %v210, 1
  %v212 = vsel %vm211, %v191, 0.0
  %vm213 = vcmp.eq.s32.totalorder %v153, 1
  %v214 = vsel %vm213, 1, 0
  %vm215 = vcmp.eq.s32.totalorder %v214, 1
  %v216 = vsel %vm215, %v208, 0.0
  %v217 = vadd.f32 %v212, %v216
  %218 = vst.msk [vmem:[%s6] sm:$0xff] %vm178, %v217
  // Predicated region
  $region22: #{generator_forward.6} parent=0 // pred_check
    _
  $region23: #{generator_forward.6} parent=0 // pred_check_branch
    %220 = sbr.rel (0) target = $region25
  $region24: #{generator_forward.6} parent=0 // pred_region
    _
  $region25: #{generator_forward.6} parent=0 // pred_fallthru
    _
  // Predicated region
  $region26: #{generator_forward.6} parent=0 // pred_check
    _
  $region27: #{generator_forward.6} parent=0 // pred_check_branch
    %222 = sbr.rel (0) target = $region29
  $region28: #{generator_forward.6} parent=0 // pred_region
    _
  $region29: #{generator_forward.6} parent=0 // pred_fallthru
    _
  // Predicated region
  $region30: #{generator_forward.6} parent=0 // pred_check
    _
  $region31: #{generator_forward.6} parent=0 // pred_check_branch
    %224 = sbr.rel (0) target = $region33
  $region32: #{generator_forward.6} parent=0 // pred_region
    _
  $region33: #{generator_forward.6} parent=0 // pred_fallthru
    _
  // Predicated region
  $region34: #{generator_forward.6} parent=0 // pred_check
    _
  $region35: #{generator_forward.6} parent=0 // pred_check_branch
    %226 = sbr.rel (0) target = $region37
  $region36: #{generator_forward.6} parent=0 // pred_region
    _
  $region37: #{generator_forward.6} parent=0 // pred_fallthru
    _

// kernel: generator_forward.7
$region0: #{generator_forward.7}
  #allocation0 [shape = 'u32[]', space=smem, size = 0x4, offset = 0x4, fixed_abs, tag = 'smem constant byte address 0x4 - core index']
  #allocation1 [shape = 'u32[144,128]{1,0:T(1,128)}', space=vmem, size = 0x12000, scoped, tag = 'internal scratch']
  %s0 = inlined_call_operand.vmem [shape: bf16[128,8], index: 0, kind: input, shape index: {}]
  %s1 = inlined_call_operand.vmem [shape: f32[1,8], index: 1, kind: input, shape index: {}]
  %s2 = inlined_call_operand.vmem [shape: f32[1,8], index: 2, kind: input, shape index: {}]
  %s3 = inlined_call_operand.vmem [shape: bf16[8,12], index: 3, kind: input, shape index: {}]
  %s4 = inlined_call_operand.vmem [shape: f32[1,12], index: 4, kind: input, shape index: {}]
  %s5 = inlined_call_operand.vmem [shape: f32[128,12], index: 5, kind: output, shape index: {0}]
  %s6 = inlined_call_operand.hbm [shape: f32[8,12], index: 6, kind: output, shape index: {1}]
  %7 = xla_tuple %s5, %s6
  %s8 = sld [smem:[#allocation0]]
  $region38: #{generator_forward.7} parent=0
    _
  %s10 = ssub.s32 1, %s8
  %s11 = scalar_select 0, %s10, %s8
  $region1: #{generator_forward.7} parent=0
    #allocation2 [shape = 'u8[4096]{0}', space=vmem, size = 0x1000, scoped, tag = 'output window, operand 1, single buffered']
    #allocation3 [shape = 's32[1]{0}', space=sflag, size = 0x4, scoped, tag = 'scoped memory for generator_forward.7']
    %12 = vsyncpa [#allocation3], 0
    // Predicated region
    $region2: #{generator_forward.7} parent=1 // pred_check
      _
    $region3: #{generator_forward.7} parent=1 // pred_check_branch
      %14 = sbr.rel (0) target = $region5
    $region4: #{generator_forward.7} parent=1 // pred_region
      _
    $region5: #{generator_forward.7} parent=1 // pred_fallthru
      _
    // Predicated region
    $region6: #{generator_forward.7} parent=1 // pred_check
      _
    $region7: #{generator_forward.7} parent=1 // pred_check_branch
      %16 = sbr.rel (0) target = $region9
    $region8: #{generator_forward.7} parent=1 // pred_region
      _
    $region9: #{generator_forward.7} parent=1 // pred_fallthru
      _
    // Predicated region
    $region10: #{generator_forward.7} parent=1 // pred_check
      _
    $region11: #{generator_forward.7} parent=1 // pred_check_branch
      %18 = sbr.rel (0) target = $region13
    $region12: #{generator_forward.7} parent=1 // pred_region
      _
    $region13: #{generator_forward.7} parent=1 // pred_fallthru
      _
    // Predicated region
    $region14: #{generator_forward.7} parent=1 // pred_check
      _
    $region15: #{generator_forward.7} parent=1 // pred_check_branch
      %20 = sbr.rel (0) target = $region17
    $region16: #{generator_forward.7} parent=1 // pred_region
      _
    $region17: #{generator_forward.7} parent=1 // pred_fallthru
      _
    // Predicated region
    $region18: #{generator_forward.7} parent=1 // pred_check
      _
    $region19: #{generator_forward.7} parent=1 // pred_check_branch
      %22 = sbr.rel (0) target = $region21
    $region20: #{generator_forward.7} parent=1 // pred_region
      _
    $region21: #{generator_forward.7} parent=1 // pred_fallthru
      _
    %v24 = vld [vmem:[%s0] sm:$0xf]
    %v25 = vld [vmem:[%s0 + $0x4] sm:$0xf]
    %v26 = vld [vmem:[%s0 + $0x8] sm:$0xf]
    %v27 = vld [vmem:[%s0 + $0xc] sm:$0xf]
    %v28 = vld [vmem:[%s0 + $0x10] sm:$0xf]
    %v29 = vld [vmem:[%s0 + $0x14] sm:$0xf]
    %v30 = vld [vmem:[%s0 + $0x18] sm:$0xf]
    %v31 = vld [vmem:[%s0 + $0x1c] sm:$0xf]
    %v32 = vld [vmem:[%s0 + $0x20] sm:$0xf]
    %v33 = vld [vmem:[%s0 + $0x24] sm:$0xf]
    %v34 = vld [vmem:[%s0 + $0x28] sm:$0xf]
    %v35 = vld [vmem:[%s0 + $0x2c] sm:$0xf]
    %v36 = vld [vmem:[%s0 + $0x30] sm:$0xf]
    %v37 = vld [vmem:[%s0 + $0x34] sm:$0xf]
    %v38 = vld [vmem:[%s0 + $0x38] sm:$0xf]
    %v39 = vld [vmem:[%s0 + $0x3c] sm:$0xf]
    %v40 = vunpack.c.l.bf16 %v24
    %v41 = vunpack.c.l.bf16 %v25
    %v42 = vunpack.c.l.bf16 %v26
    %v43 = vunpack.c.l.bf16 %v27
    %v44 = vunpack.c.l.bf16 %v28
    %v45 = vunpack.c.l.bf16 %v29
    %v46 = vunpack.c.l.bf16 %v30
    %v47 = vunpack.c.l.bf16 %v31
    %v48 = vunpack.c.l.bf16 %v32
    %v49 = vunpack.c.l.bf16 %v33
    %v50 = vunpack.c.l.bf16 %v34
    %v51 = vunpack.c.l.bf16 %v35
    %v52 = vunpack.c.l.bf16 %v36
    %v53 = vunpack.c.l.bf16 %v37
    %v54 = vunpack.c.l.bf16 %v38
    %v55 = vunpack.c.l.bf16 %v39
    %v56 = vld [vmem:[%s1] sm:$0x1]
    %v58 = vlaneseq
    %v59 = vshrl.u32 %v58, 7
    %v60 = vsub.s32 0, %v59
    %v61 = vrot.slane %v56, %v60
    %v63 = vmul.f32 %v40, %v61
    %v64 = vmul.f32 %v41, %v61
    %v65 = vmul.f32 %v42, %v61
    %v66 = vmul.f32 %v43, %v61
    %v67 = vmul.f32 %v44, %v61
    %v68 = vmul.f32 %v45, %v61
    %v69 = vmul.f32 %v46, %v61
    %v70 = vmul.f32 %v47, %v61
    %v71 = vmul.f32 %v48, %v61
    %v72 = vmul.f32 %v49, %v61
    %v73 = vmul.f32 %v50, %v61
    %v74 = vmul.f32 %v51, %v61
    %v75 = vmul.f32 %v52, %v61
    %v76 = vmul.f32 %v53, %v61
    %v77 = vmul.f32 %v54, %v61
    %v78 = vmul.f32 %v55, %v61
    %v79 = vld [vmem:[%s2] sm:$0x1]
    %v81 = vlaneseq
    %v82 = vshrl.u32 %v81, 7
    %v83 = vsub.s32 0, %v82
    %v84 = vrot.slane %v79, %v83
    %v86 = vadd.f32 %v63, %v84
    %v87 = vadd.f32 %v64, %v84
    %v88 = vadd.f32 %v65, %v84
    %v89 = vadd.f32 %v66, %v84
    %v90 = vadd.f32 %v67, %v84
    %v91 = vadd.f32 %v68, %v84
    %v92 = vadd.f32 %v69, %v84
    %v93 = vadd.f32 %v70, %v84
    %v94 = vadd.f32 %v71, %v84
    %v95 = vadd.f32 %v72, %v84
    %v96 = vadd.f32 %v73, %v84
    %v97 = vadd.f32 %v74, %v84
    %v98 = vadd.f32 %v75, %v84
    %v99 = vadd.f32 %v76, %v84
    %v100 = vadd.f32 %v77, %v84
    %v101 = vadd.f32 %v78, %v84
    %v102 = vmax.f32 %v86, 0.0
    %v103 = vmax.f32 %v87, 0.0
    %v104 = vmax.f32 %v88, 0.0
    %v105 = vmax.f32 %v89, 0.0
    %v106 = vmax.f32 %v90, 0.0
    %v107 = vmax.f32 %v91, 0.0
    %v108 = vmax.f32 %v92, 0.0
    %v109 = vmax.f32 %v93, 0.0
    %v110 = vmax.f32 %v94, 0.0
    %v111 = vmax.f32 %v95, 0.0
    %v112 = vmax.f32 %v96, 0.0
    %v113 = vmax.f32 %v97, 0.0
    %v114 = vmax.f32 %v98, 0.0
    %v115 = vmax.f32 %v99, 0.0
    %v116 = vmax.f32 %v100, 0.0
    %v117 = vmax.f32 %v101, 0.0
    %v118 = vpack.c.bf16 %v103, %v102
    %v119 = vpack.c.bf16 %v105, %v104
    %v120 = vpack.c.bf16 %v107, %v106
    %v121 = vpack.c.bf16 %v109, %v108
    %v122 = vpack.c.bf16 %v111, %v110
    %v123 = vpack.c.bf16 %v113, %v112
    %v124 = vpack.c.bf16 %v115, %v114
    %v125 = vpack.c.bf16 %v117, %v116
    %v126 = vld [vmem:[%s3] sm:$0xf]
    %v127 = vld [vmem:[%s4] sm:$0x1]
    %v129 = vlaneseq
    %v130 = vshrl.u32 %v129, 7
    %v131 = vsub.s32 0, %v130
    %v132 = vrot.slane %v127, %v131
    %vm134 = vcmask 64512
    %v136 = vsel %vm134, %v118, 0
    %v139 = vsel %vm134, %v119, 0
    %v142 = vsel %vm134, %v120, 0
    %v145 = vsel %vm134, %v121, 0
    %v148 = vsel %vm134, %v122, 0
    %v151 = vsel %vm134, %v123, 0
    %v154 = vsel %vm134, %v124, 0
    %v157 = vsel %vm134, %v125, 0
    %vm159 = vcmask 1043456
    %v161 = vsel %vm159, %v126, 0
    %163 = vmatprep.subr.bf16.mxu0 0
    %164 = vmatpush1.bf16.msra.mxu0 %v161
    %165 = vmatprep.subr.bf16.mxu0 0
    %166 = vmatpush1.bf16.msra.mxu0 0
    %167 = vmatprep.subr.bf16.mxu0 0
    %168 = vmatpush1.bf16.msra.mxu0 0
    %169 = vmatprep.subr.bf16.mxu0 0
    %170 = vmatpush1.bf16.msra.mxu0 0
    %171 = vmatprep.subr.bf16.mxu0 0
    %172 = vmatpush1.bf16.msra.mxu0 0
    %173 = vmatprep.subr.bf16.mxu0 0
    %174 = vmatpush1.bf16.msra.mxu0 0
    %175 = vmatprep.subr.bf16.mxu0 0
    %176 = vmatpush1.bf16.msra.mxu0 0
    %177 = vmatprep.subr.bf16.mxu0 0
    %178 = vmatpush1.bf16.msra.mxu0 0
    %179 = vmatprep.subr.bf16.mxu0 0
    %180 = vmatpush1.bf16.msra.mxu0 0
    %181 = vmatprep.subr.bf16.mxu0 0
    %182 = vmatpush1.bf16.msra.mxu0 0
    %183 = vmatprep.subr.bf16.mxu0 0
    %184 = vmatpush1.bf16.msra.mxu0 0
    %185 = vmatprep.subr.bf16.mxu0 0
    %186 = vmatpush1.bf16.msra.mxu0 0
    %187 = vmatprep.subr.bf16.mxu0 0
    %188 = vmatpush1.bf16.msra.mxu0 0
    %189 = vmatprep.subr.bf16.mxu0 0
    %190 = vmatpush1.bf16.msra.mxu0 0
    %191 = vmatprep.subr.bf16.mxu0 0
    %192 = vmatpush1.bf16.msra.mxu0 0
    %193 = vmatprep.subr.bf16.mxu0 0
    %194 = vmatpush1.bf16.msra.mxu0 0
    %195 = vmatprep.mubr.bf16.mxu0 0
    %196 = vmatmul.mubr.bf16.gmra.mrb[0].mxu0 %v136
    %v197 = vpop.f32.mrb[0].mxu0
    %v198 = vadd.f32 %v132, %v197
    %v199 = vpop.f32.mrb[0].mxu0
    %v200 = vpop.f32.mrb[0].mxu0
    %v201 = vadd.f32 %v132, %v200
    %v202 = vpop.f32.mrb[0].mxu0
    %203 = vmatprep.mubr.bf16.mxu0 0
    %204 = vmatmul.mubr.bf16.gmra.mrb[0].mxu0 %v139
    %v205 = vpop.f32.mrb[0].mxu0
    %v206 = vadd.f32 %v132, %v205
    %v207 = vpop.f32.mrb[0].mxu0
    %v208 = vpop.f32.mrb[0].mxu0
    %v209 = vadd.f32 %v132, %v208
    %v210 = vpop.f32.mrb[0].mxu0
    %211 = vmatprep.mubr.bf16.mxu0 0
    %212 = vmatmul.mubr.bf16.gmra.mrb[0].mxu0 %v142
    %v213 = vpop.f32.mrb[0].mxu0
    %v214 = vadd.f32 %v132, %v213
    %v215 = vpop.f32.mrb[0].mxu0
    %v216 = vpop.f32.mrb[0].mxu0
    %v217 = vadd.f32 %v132, %v216
    %v218 = vpop.f32.mrb[0].mxu0
    %219 = vmatprep.mubr.bf16.mxu0 0
    %220 = vmatmul.mubr.bf16.gmra.mrb[0].mxu0 %v145
    %v221 = vpop.f32.mrb[0].mxu0
    %v222 = vadd.f32 %v132, %v221
    %v223 = vpop.f32.mrb[0].mxu0
    %v224 = vpop.f32.mrb[0].mxu0
    %v225 = vadd.f32 %v132, %v224
    %v226 = vpop.f32.mrb[0].mxu0
    %227 = vmatprep.mubr.bf16.mxu0 0
    %228 = vmatmul.mubr.bf16.gmra.mrb[0].mxu0 %v148
    %v229 = vpop.f32.mrb[0].mxu0
    %v230 = vadd.f32 %v132, %v229
    %v231 = vpop.f32.mrb[0].mxu0
    %v232 = vpop.f32.mrb[0].mxu0
    %v233 = vadd.f32 %v132, %v232
    %v234 = vpop.f32.mrb[0].mxu0
    %235 = vmatprep.mubr.bf16.mxu0 0
    %236 = vmatmul.mubr.bf16.gmra.mrb[0].mxu0 %v151
    %v237 = vpop.f32.mrb[0].mxu0
    %v238 = vadd.f32 %v132, %v237
    %v239 = vpop.f32.mrb[0].mxu0
    %v240 = vpop.f32.mrb[0].mxu0
    %v241 = vadd.f32 %v132, %v240
    %v242 = vpop.f32.mrb[0].mxu0
    %243 = vmatprep.mubr.bf16.mxu0 0
    %244 = vmatmul.mubr.bf16.gmra.mrb[0].mxu0 %v154
    %v245 = vpop.f32.mrb[0].mxu0
    %v246 = vadd.f32 %v132, %v245
    %v247 = vpop.f32.mrb[0].mxu0
    %v248 = vpop.f32.mrb[0].mxu0
    %v249 = vadd.f32 %v132, %v248
    %v250 = vpop.f32.mrb[0].mxu0
    %251 = vmatprep.mubr.bf16.mxu0 0
    %252 = vmatmul.mubr.bf16.gmra.mrb[0].mxu0 %v157
    %v253 = vpop.f32.mrb[0].mxu0
    %v254 = vadd.f32 %v132, %v253
    %v255 = vpop.f32.mrb[0].mxu0
    %v256 = vpop.f32.mrb[0].mxu0
    %v257 = vadd.f32 %v132, %v256
    %v258 = vpop.f32.mrb[0].mxu0
    %259 = vdwg.mxu0
    %v260 = vtanh.pop %v198
    %v261 = vtanh.pop %v201
    %v262 = vtanh.pop %v206
    %v263 = vtanh.pop %v209
    %v264 = vtanh.pop %v214
    %v265 = vtanh.pop %v217
    %v266 = vtanh.pop %v222
    %v267 = vtanh.pop %v225
    %v268 = vtanh.pop %v230
    %v269 = vtanh.pop %v233
    %v270 = vtanh.pop %v238
    %v271 = vtanh.pop %v241
    %v272 = vtanh.pop %v246
    %v273 = vtanh.pop %v249
    %v274 = vtanh.pop %v254
    %v275 = vtanh.pop %v257
    %vm276 = vcmask 97280
    %277 = vst.msk [vmem:[%s5] sm:$0xff] %vm276, %v260
    %278 = vst.msk [vmem:[%s5 + $0x8] sm:$0xff] %vm276, %v261
    %279 = vst.msk [vmem:[%s5 + $0x10] sm:$0xff] %vm276, %v262
    %280 = vst.msk [vmem:[%s5 + $0x18] sm:$0xff] %vm276, %v263
    %281 = vst.msk [vmem:[%s5 + $0x20] sm:$0xff] %vm276, %v264
    %282 = vst.msk [vmem:[%s5 + $0x28] sm:$0xff] %vm276, %v265
    %283 = vst.msk [vmem:[%s5 + $0x30] sm:$0xff] %vm276, %v266
    %284 = vst.msk [vmem:[%s5 + $0x38] sm:$0xff] %vm276, %v267
    %285 = vst.msk [vmem:[%s5 + $0x40] sm:$0xff] %vm276, %v268
    %286 = vst.msk [vmem:[%s5 + $0x48] sm:$0xff] %vm276, %v269
    %287 = vst.msk [vmem:[%s5 + $0x50] sm:$0xff] %vm276, %v270
    %288 = vst.msk [vmem:[%s5 + $0x58] sm:$0xff] %vm276, %v271
    %289 = vst.msk [vmem:[%s5 + $0x60] sm:$0xff] %vm276, %v272
    %290 = vst.msk [vmem:[%s5 + $0x68] sm:$0xff] %vm276, %v273
    %291 = vst.msk [vmem:[%s5 + $0x70] sm:$0xff] %vm276, %v274
    %292 = vst.msk [vmem:[%s5 + $0x78] sm:$0xff] %vm276, %v275
    %s293 = smul.u32 0, 128
    %v294 = vlaneseq
    %v295 = vshrl.u32 %v294, 7
    %v296 = vadd.s32 %v295, 8
    %v297 = vadd.s32 %v295, 16
    %v298 = vadd.s32 %v295, 24
    %v299 = vadd.s32 %v295, 32
    %v300 = vadd.s32 %v295, 40
    %v301 = vadd.s32 %v295, 48
    %v302 = vadd.s32 %v295, 56
    %v303 = vadd.s32 %v295, 64
    %v304 = vadd.s32 %v295, 72
    %v305 = vadd.s32 %v295, 80
    %v306 = vadd.s32 %v295, 88
    %v307 = vadd.s32 %v295, 96
    %v308 = vadd.s32 %v295, 104
    %v309 = vadd.s32 %v295, 112
    %v310 = vadd.s32 %v295, 120
    %v311 = vstv %s293
    %v312 = vadd.s32 %v311, %v295
    %v313 = vadd.s32 %v311, %v296
    %v314 = vadd.s32 %v311, %v297
    %v315 = vadd.s32 %v311, %v298
    %v316 = vadd.s32 %v311, %v299
    %v317 = vadd.s32 %v311, %v300
    %v318 = vadd.s32 %v311, %v301
    %v319 = vadd.s32 %v311, %v302
    %v320 = vadd.s32 %v311, %v303
    %v321 = vadd.s32 %v311, %v304
    %v322 = vadd.s32 %v311, %v305
    %v323 = vadd.s32 %v311, %v306
    %v324 = vadd.s32 %v311, %v307
    %v325 = vadd.s32 %v311, %v308
    %v326 = vadd.s32 %v311, %v309
    %v327 = vadd.s32 %v311, %v310
    %vm328 = vcmp.lt.s32.totalorder %v312, 128
    %vm329 = vcmp.lt.s32.totalorder %v313, 128
    %vm330 = vcmp.lt.s32.totalorder %v314, 128
    %vm331 = vcmp.lt.s32.totalorder %v315, 128
    %vm332 = vcmp.lt.s32.totalorder %v316, 128
    %vm333 = vcmp.lt.s32.totalorder %v317, 128
    %vm334 = vcmp.lt.s32.totalorder %v318, 128
    %vm335 = vcmp.lt.s32.totalorder %v319, 128
    %vm336 = vcmp.lt.s32.totalorder %v320, 128
    %vm337 = vcmp.lt.s32.totalorder %v321, 128
    %vm338 = vcmp.lt.s32.totalorder %v322, 128
    %vm339 = vcmp.lt.s32.totalorder %v323, 128
    %vm340 = vcmp.lt.s32.totalorder %v324, 128
    %vm341 = vcmp.lt.s32.totalorder %v325, 128
    %vm342 = vcmp.lt.s32.totalorder %v326, 128
    %vm343 = vcmp.lt.s32.totalorder %v327, 128
    %v344 = vsel %vm328, 1, 0
    %v345 = vsel %vm329, 1, 0
    %v346 = vsel %vm330, 1, 0
    %v347 = vsel %vm331, 1, 0
    %v348 = vsel %vm332, 1, 0
    %v349 = vsel %vm333, 1, 0
    %v350 = vsel %vm334, 1, 0
    %v351 = vsel %vm335, 1, 0
    %v352 = vsel %vm336, 1, 0
    %v353 = vsel %vm337, 1, 0
    %v354 = vsel %vm338, 1, 0
    %v355 = vsel %vm339, 1, 0
    %v356 = vsel %vm340, 1, 0
    %v357 = vsel %vm341, 1, 0
    %v358 = vsel %vm342, 1, 0
    %v359 = vsel %vm343, 1, 0
    %v360 = vcvt.s32.f32 %v344
    %v361 = vcvt.s32.f32 %v345
    %v362 = vcvt.s32.f32 %v346
    %v363 = vcvt.s32.f32 %v347
    %v364 = vcvt.s32.f32 %v348
    %v365 = vcvt.s32.f32 %v349
    %v366 = vcvt.s32.f32 %v350
    %v367 = vcvt.s32.f32 %v351
    %v368 = vcvt.s32.f32 %v352
    %v369 = vcvt.s32.f32 %v353
    %v370 = vcvt.s32.f32 %v354
    %v371 = vcvt.s32.f32 %v355
    %v372 = vcvt.s32.f32 %v356
    %v373 = vcvt.s32.f32 %v357
    %v374 = vcvt.s32.f32 %v358
    %v375 = vcvt.s32.f32 %v359
    %v376 = vmul.f32 %v260, %v360
    %v377 = vmul.f32 %v261, %v361
    %v378 = vmul.f32 %v262, %v362
    %v379 = vmul.f32 %v263, %v363
    %v380 = vmul.f32 %v264, %v364
    %v381 = vmul.f32 %v265, %v365
    %v382 = vmul.f32 %v266, %v366
    %v383 = vmul.f32 %v267, %v367
    %v384 = vmul.f32 %v268, %v368
    %v385 = vmul.f32 %v269, %v369
    %v386 = vmul.f32 %v270, %v370
    %v387 = vmul.f32 %v271, %v371
    %v388 = vmul.f32 %v272, %v372
    %v389 = vmul.f32 %v273, %v373
    %v390 = vmul.f32 %v274, %v374
    %v391 = vmul.f32 %v275, %v375
    %v392 = vsel %vm276, %v376, 0.0
    %v393 = vsel %vm276, %v377, 0.0
    %v394 = vadd.f32 %v392, %v393
    %v395 = vsel %vm276, %v378, 0.0
    %v396 = vadd.f32 %v394, %v395
    %v397 = vsel %vm276, %v379, 0.0
    %v398 = vadd.f32 %v396, %v397
    %v399 = vsel %vm276, %v380, 0.0
    %v400 = vadd.f32 %v398, %v399
    %v401 = vsel %vm276, %v381, 0.0
    %v402 = vadd.f32 %v400, %v401
    %v403 = vsel %vm276, %v382, 0.0
    %v404 = vadd.f32 %v402, %v403
    %v405 = vsel %vm276, %v383, 0.0
    %v406 = vadd.f32 %v404, %v405
    %v407 = vsel %vm276, %v384, 0.0
    %v408 = vadd.f32 %v406, %v407
    %v409 = vsel %vm276, %v385, 0.0
    %v410 = vadd.f32 %v408, %v409
    %v411 = vsel %vm276, %v386, 0.0
    %v412 = vadd.f32 %v410, %v411
    %v413 = vsel %vm276, %v387, 0.0
    %v414 = vadd.f32 %v412, %v413
    %v415 = vsel %vm276, %v388, 0.0
    %v416 = vadd.f32 %v414, %v415
    %v417 = vsel %vm276, %v389, 0.0
    %v418 = vadd.f32 %v416, %v417
    %v419 = vsel %vm276, %v390, 0.0
    %v420 = vadd.f32 %v418, %v419
    %v421 = vsel %vm276, %v391, 0.0
    %v422 = vadd.f32 %v420, %v421
    %v423 = vrot.slane %v422, 4
    %v424 = vadd.f32 %v422, %v423
    %v425 = vrot.slane %v424, 2
    %v426 = vadd.f32 %v424, %v425
    %v427 = vrot.slane %v426, 1
    %v428 = vadd.f32 %v426, %v427
    %v429 = vmul.f32 %v376, %v376
    %v430 = vmul.f32 %v377, %v377
    %v431 = vmul.f32 %v378, %v378
    %v432 = vmul.f32 %v379, %v379
    %v433 = vmul.f32 %v380, %v380
    %v434 = vmul.f32 %v381, %v381
    %v435 = vmul.f32 %v382, %v382
    %v436 = vmul.f32 %v383, %v383
    %v437 = vmul.f32 %v384, %v384
    %v438 = vmul.f32 %v385, %v385
    %v439 = vmul.f32 %v386, %v386
    %v440 = vmul.f32 %v387, %v387
    %v441 = vmul.f32 %v388, %v388
    %v442 = vmul.f32 %v389, %v389
    %v443 = vmul.f32 %v390, %v390
    %v444 = vmul.f32 %v391, %v391
    %v445 = vsel %vm276, %v429, 0.0
    %v446 = vsel %vm276, %v430, 0.0
    %v447 = vadd.f32 %v445, %v446
    %v448 = vsel %vm276, %v431, 0.0
    %v449 = vadd.f32 %v447, %v448
    %v450 = vsel %vm276, %v432, 0.0
    %v451 = vadd.f32 %v449, %v450
    %v452 = vsel %vm276, %v433, 0.0
    %v453 = vadd.f32 %v451, %v452
    %v454 = vsel %vm276, %v434, 0.0
    %v455 = vadd.f32 %v453, %v454
    %v456 = vsel %vm276, %v435, 0.0
    %v457 = vadd.f32 %v455, %v456
    %v458 = vsel %vm276, %v436, 0.0
    %v459 = vadd.f32 %v457, %v458
    %v460 = vsel %vm276, %v437, 0.0
    %v461 = vadd.f32 %v459, %v460
    %v462 = vsel %vm276, %v438, 0.0
    %v463 = vadd.f32 %v461, %v462
    %v464 = vsel %vm276, %v439, 0.0
    %v465 = vadd.f32 %v463, %v464
    %v466 = vsel %vm276, %v440, 0.0
    %v467 = vadd.f32 %v465, %v466
    %v468 = vsel %vm276, %v441, 0.0
    %v469 = vadd.f32 %v467, %v468
    %v470 = vsel %vm276, %v442, 0.0
    %v471 = vadd.f32 %v469, %v470
    %v472 = vsel %vm276, %v443, 0.0
    %v473 = vadd.f32 %v471, %v472
    %v474 = vsel %vm276, %v444, 0.0
    %v475 = vadd.f32 %v473, %v474
    %v476 = vrot.slane %v475, 4
    %v477 = vadd.f32 %v475, %v476
    %v478 = vrot.slane %v477, 2
    %v479 = vadd.f32 %v477, %v478
    %v480 = vrot.slane %v479, 1
    %v481 = vadd.f32 %v479, %v480
    %vm482 = vcmp.eq.s32.totalorder %v295, 0
    %v483 = vsel %vm482, 1, 0
    %vm484 = vcmp.eq.s32.totalorder %v483, 1
    %v485 = vsel %vm484, %v428, 0.0
    %vm486 = vcmp.eq.s32.totalorder %v295, 1
    %v487 = vsel %vm486, 1, 0
    %vm488 = vcmp.eq.s32.totalorder %v487, 1
    %v489 = vsel %vm488, %v481, 0.0
    %v490 = vadd.f32 %v485, %v489
    %491 = vst.msk [vmem:[#allocation2] sm:$0xff] %vm276, %v490
    // Predicated region
    $region22: #{generator_forward.7} parent=1 // pred_check
      _
    $region23: #{generator_forward.7} parent=1 // pred_check_branch
      %493 = sbr.rel (0) target = $region25
    $region24: #{generator_forward.7} parent=1 // pred_region
      _
    $region25: #{generator_forward.7} parent=1 // pred_fallthru
      _
    // Predicated region
    $region26: #{generator_forward.7} parent=1 // pred_check
      _
    $region27: #{generator_forward.7} parent=1 // pred_check_branch
      %495 = sbr.rel (0) target = $region29
    $region28: #{generator_forward.7} parent=1 // pred_region
      %s497 = ssub.s32 128, 128
      %498 = vsyncadd [#allocation3], %s497
      %s500 = sshll.u32 [#allocation2], 4
      %s501 = int_to_ptr.vmem [resolvable:$true] %s500
      %503 = dma.vmem_to_hbm [thread:$0]  %s501, 128, %s6, [#allocation3]
    $region29: #{generator_forward.7} parent=1 // pred_fallthru
      _
    // Predicated region
    $region30: #{generator_forward.7} parent=1 // pred_check
      _
    $region31: #{generator_forward.7} parent=1 // pred_check_branch
      %505 = sbr.rel (0) target = $region33
    $region32: #{generator_forward.7} parent=1 // pred_region
      _
    $region33: #{generator_forward.7} parent=1 // pred_fallthru
      _
    // Predicated region
    $region34: #{generator_forward.7} parent=1 // pred_check
      _
    $region35: #{generator_forward.7} parent=1 // pred_check_branch
      %507 = sbr.rel (0) target = $region37
    $region36: #{generator_forward.7} parent=1 // pred_region
      %508 = dma.done [#allocation3], 128
    $region37: #{generator_forward.7} parent=1 // pred_fallthru
      _
    %509 = vsyncpa [#allocation3], 1

</llo_original>
